<compile_context>
chip_gen: v5e
topology: v5e:2x2
jax: 0.10.0
libtpu: 0.0.40
codegen_flags: <defaults>
</compile_context>

<pallas_src>
import functools

import jax
import jax.numpy as jnp
from jax.experimental import pallas as pl
from jax.experimental.pallas import tpu as pltpu

INPUT_DIM = 128       # em (64) ++ eq (64)
HALF_DIM = 64
HIDDEN_DIM = 256
PITCH_CLASSES = 52
LOGITS_PAD = 64       # logits padded to 64 lanes for lane-dense packing
OUTPUT_DIM = 64
LN_EPS = 1e-5


# ----------------------------------------------------------------------------
# Kernel
# ----------------------------------------------------------------------------
def pitch_encoder_kernel(
    x_ref,        # bf16 [tm, 128]   pre-concatenated (em ++ eq), pre-cast
    w1_ref,       # bf16 [128, 256]  first Linear weight
    wh_ref,       # bf16 [4, 256, 256] stacked hidden Linear weights
    b_ref,        # f32  [5, 256]    Linear biases (layers 1..5)
    gb_ref,       # f32  [10, 256]   (gamma, beta) per layer
    w6_ref,       # bf16 [256, 64]   final transcriber weight (zero-padded cols)
    b6_ref,       # f32  [1, 64]     final transcriber bias   (zero-padded)
    pws_ref,      # bf16 [3, 64, 64] fc_proj weights (pw1 zero-padded rows)
    pbs_ref,      # f32  [3, 64]     fc_proj biases
    out_ref,      # f32  [tm, 128] = latent(64) ++ logits_padded(64)
    *, bf16_tail,
):
    f32 = jnp.float32
    bf16 = jnp.bfloat16

    def ln_relu(h, layer):
        # bias -> LayerNorm (two-pass variance, f32) -> affine + ReLU.
        h = h + b_ref[layer]
        mu = jnp.mean(h, axis=-1, keepdims=True)
        d = h - mu
        var = jnp.mean(d * d, axis=-1, keepdims=True)
        hn = d * jax.lax.rsqrt(var + LN_EPS)
        g = gb_ref[2 * layer]
        be = gb_ref[2 * layer + 1]
        if bf16_tail:
            # bf16 affine + ReLU (v6e/v7x): halves the VALU tail and already
            # produces the bf16 operand for the next matmul.
            hn = hn.astype(bf16) * g.astype(bf16) + be.astype(bf16)
            return jnp.maximum(hn, 0.0)
        # f32 tail (v5e): cast once at the end.
        hn = hn * g + be
        return jnp.maximum(hn, 0.0).astype(bf16)

    # Layer 1: single K=128 MXU pass (concat already fused in the wrapper).
    h = jnp.dot(x_ref[...], w1_ref[...], preferred_element_type=f32)
    h = ln_relu(h, 0)

    # Layers 2..5
    for l in range(4):
        h = jnp.dot(h, wh_ref[l], preferred_element_type=f32)
        h = ln_relu(h, l + 1)

    # Final transcriber Linear -> (padded) pitch logits
    logits = jnp.dot(h, w6_ref[...], preferred_element_type=f32) + b6_ref[...]

    # Stochastic binarization, eval mode: sigmoid(x) > 0.5  <=>  x > 0
    # (padded logit columns are exactly 0 -> y_bin padding stays 0)
    y = (logits > 0.0).astype(bf16)

    # fc_proj: Linear -> ReLU -> Linear -> ReLU -> Linear
    z = jnp.maximum(
        jnp.dot(y, pws_ref[0], preferred_element_type=f32) + pbs_ref[0], 0.0)
    z = jnp.maximum(
        jnp.dot(z.astype(bf16), pws_ref[1], preferred_element_type=f32)
        + pbs_ref[1], 0.0)
    z = jnp.dot(z.astype(bf16), pws_ref[2], preferred_element_type=f32) + pbs_ref[2]

    # Two aligned 64-lane stores into the resident lane-dense [tm,128] block
    # (no concat temporary): latent(64) ++ logits_padded(64).
    out_ref[:, :OUTPUT_DIM] = z.astype(out_ref.dtype)
    out_ref[:, OUTPUT_DIM:] = logits.astype(out_ref.dtype)


# ----------------------------------------------------------------------------
# Parameter packing (f32 "PyTorch layout" params -> kernel layout)
# ----------------------------------------------------------------------------
def pack_params(params):
    p = list(params)

    w1 = p[0].astype(jnp.bfloat16)                                    # [128,256]
    wh = jnp.stack([p[4], p[8], p[12], p[16]]).astype(jnp.bfloat16)   # [4,256,256]

    bias = jnp.stack([p[4 * l + 1].reshape(-1) for l in range(5)]
                     ).astype(jnp.float32)                            # [5,256]
    gb_rows = []
    for l in range(5):
        gb_rows += [p[4 * l + 2].reshape(-1), p[4 * l + 3].reshape(-1)]
    gb = jnp.stack(gb_rows).astype(jnp.float32)                       # [10,256]

    w6, b6 = p[20], p[21]
    w6p = (jnp.zeros((HIDDEN_DIM, LOGITS_PAD), jnp.float32)
           .at[:, :PITCH_CLASSES].set(w6)).astype(jnp.bfloat16)       # [256,64]
    b6p = jnp.zeros((1, LOGITS_PAD), jnp.float32).at[:, :PITCH_CLASSES].set(b6)

    pw1, pb1, pw2, pb2, pw3, pb3 = p[22:28]
    pw1p = jnp.zeros((LOGITS_PAD, OUTPUT_DIM), jnp.float32).at[:PITCH_CLASSES].set(pw1)
    pws = jnp.stack([pw1p, pw2, pw3]).astype(jnp.bfloat16)            # [3,64,64]
    pbs = jnp.stack([pb1.reshape(-1), pb2.reshape(-1), pb3.reshape(-1)]
                    ).astype(jnp.float32)                             # [3,64]

    return (w1, wh, bias, gb, w6p, b6p, pws, pbs)


# ----------------------------------------------------------------------------
# Wrapper
# ----------------------------------------------------------------------------
def _round_up(x, m):
    return (x + m - 1) // m * m


def _full_spec(shape):
    # Whole-array block, constant index across the row grid (resident weight).
    return pl.BlockSpec(shape, lambda i: (0,) * len(shape))


@functools.partial(jax.jit, static_argnames=("tm", "bf16_tail"))
def pitch_encoder_forward(em, eq, packed, tm=1024, bf16_tail=True):
    B, T, half = em.shape
    assert half == HALF_DIM
    assert tm % 8 == 0
    N = B * T

    # Single fused prep op: concat + flatten + pad + cast -> [Npad,128] bf16.
    x = jnp.concatenate([em, eq], axis=-1).reshape(N, INPUT_DIM)
    tm_eff = min(tm, _round_up(N, 8))
    n_pad = (-N) % tm_eff
    if n_pad:
        x = jnp.pad(x, ((0, n_pad), (0, 0)))
    x = x.astype(jnp.bfloat16)
    Npad = N + n_pad

    w1, wh, bias, gb, w6p, b6p, pws, pbs = packed

    in_specs = [
        pl.BlockSpec((tm_eff, INPUT_DIM), lambda i: (i, 0)),   # activation tile
        _full_spec(w1.shape),
        _full_spec(wh.shape),
        _full_spec(bias.shape),
        _full_spec(gb.shape),
        _full_spec(w6p.shape),
        _full_spec(b6p.shape),
        _full_spec(pws.shape),
        _full_spec(pbs.shape),
    ]

    flops_per_row = 2 * (INPUT_DIM * HIDDEN_DIM + 4 * HIDDEN_DIM * HIDDEN_DIM
                         + HIDDEN_DIM * LOGITS_PAD + 3 * LOGITS_PAD * OUTPUT_DIM)
    weight_bytes = sum(int(a.size) * a.dtype.itemsize
                       for a in (w1, wh, bias, gb, w6p, b6p, pws, pbs))
    cost = pl.CostEstimate(
        flops=Npad * flops_per_row,
        transcendentals=Npad * 5,                       # one rsqrt per LN row
        bytes_accessed=(Npad * INPUT_DIM * 2            # bf16 input
                        + Npad * (OUTPUT_DIM + LOGITS_PAD) * 4   # f32 output
                        + weight_bytes),
    )

    out = pl.pallas_call(
        functools.partial(pitch_encoder_kernel, bf16_tail=bf16_tail),
        grid=(Npad // tm_eff,),
        in_specs=in_specs,
        out_specs=pl.BlockSpec((tm_eff, OUTPUT_DIM + LOGITS_PAD), lambda i: (i, 0)),
        out_shape=jax.ShapeDtypeStruct((Npad, OUTPUT_DIM + LOGITS_PAD), jnp.float32),
        compiler_params=pltpu.CompilerParams(
            dimension_semantics=("parallel",),
            vmem_limit_bytes=32 * 1024 * 1024,
        ),
        cost_estimate=cost,
    )(x, w1, wh, bias, gb, w6p, b6p, pws, pbs)

    latent = out[:N, :OUTPUT_DIM].reshape(B, T, OUTPUT_DIM)
    logits = out[:N, OUTPUT_DIM:OUTPUT_DIM + PITCH_CLASSES].reshape(B, T, PITCH_CLASSES)
    return latent, logits


# ----------------------------------------------------------------------------
# Deterministic parameter construction (synthetic init, no checkpoint)
# ----------------------------------------------------------------------------
def make_params(key):
    dims_transcriber = [
        (INPUT_DIM, HIDDEN_DIM),
        (HIDDEN_DIM, HIDDEN_DIM),
        (HIDDEN_DIM, HIDDEN_DIM),
        (HIDDEN_DIM, HIDDEN_DIM),
        (HIDDEN_DIM, HIDDEN_DIM),
    ]
    params = []
    keys = jax.random.split(key, 32)
    k_idx = 0

    def nk():
        nonlocal k_idx
        k = keys[k_idx]
        k_idx += 1
        return k

    # 5 x (Linear, LayerNorm)
    for (din, dout) in dims_transcriber:
        w = jax.random.normal(nk(), (din, dout), jnp.float32) * (1.0 / jnp.sqrt(din))
        b = jax.random.normal(nk(), (1, dout), jnp.float32) * 0.01
        gamma = jnp.ones((1, dout), jnp.float32)
        beta = jnp.zeros((1, dout), jnp.float32)
        params += [w, b, gamma, beta]

    # final transcriber Linear -> pitch_classes
    w6 = jax.random.normal(nk(), (HIDDEN_DIM, PITCH_CLASSES), jnp.float32) * (
        1.0 / jnp.sqrt(HIDDEN_DIM))
    b6 = jax.random.normal(nk(), (1, PITCH_CLASSES), jnp.float32) * 0.01
    params += [w6, b6]

    # fc_proj: Linear(52,64), Linear(64,64), Linear(64,64)
    proj_dims = [(PITCH_CLASSES, OUTPUT_DIM), (OUTPUT_DIM, OUTPUT_DIM),
                 (OUTPUT_DIM, OUTPUT_DIM)]
    for (din, dout) in proj_dims:
        w = jax.random.normal(nk(), (din, dout), jnp.float32) * (1.0 / jnp.sqrt(din))
        b = jax.random.normal(nk(), (1, dout), jnp.float32) * 0.01
        params += [w, b]

    return tuple(params)


# ----------------------------------------------------------------------------
# Pure-JAX reference (eval semantics, same bf16 matmul numerics) for checking
# ----------------------------------------------------------------------------
def reference_forward(em, eq, params):
    bf = lambda a: a.astype(jnp.bfloat16)
    x = jnp.concatenate([em, eq], axis=-1).reshape(-1, INPUT_DIM)
    p = list(params)
    h = x
    for layer in range(5):
        w, b, g, be = p[layer * 4: layer * 4 + 4]
        h = jnp.dot(bf(h), bf(w), preferred_element_type=jnp.float32) + b
        mu = jnp.mean(h, axis=-1, keepdims=True)
        var = jnp.mean((h - mu) ** 2, axis=-1, keepdims=True)
        h = (h - mu) / jnp.sqrt(var + LN_EPS)
        h = h * g + be
        h = jnp.maximum(h, 0.0)
    w6, b6 = p[20], p[21]
    logits = jnp.dot(bf(h), bf(w6), preferred_element_type=jnp.float32) + b6
    y_bin = (logits > 0.0).astype(jnp.float32)
    pw1, pb1, pw2, pb2, pw3, pb3 = p[22:28]
    z = jnp.maximum(jnp.dot(bf(y_bin), bf(pw1), preferred_element_type=jnp.float32) + pb1, 0.0)
    z = jnp.maximum(jnp.dot(bf(z), bf(pw2), preferred_element_type=jnp.float32) + pb2, 0.0)
    z = jnp.dot(bf(z), bf(pw3), preferred_element_type=jnp.float32) + pb3
    return z, logits


if __name__ == "__main__":
    key = jax.random.PRNGKey(0)
    k_em, k_eq, k_par = jax.random.split(key, 3)

    B, T = 2, 8
    em = jax.random.normal(k_em, (B, T, HALF_DIM), jnp.float32)
    eq = jax.random.normal(k_eq, (B, T, HALF_DIM), jnp.float32)
    params = make_params(k_par)
    packed = pack_params(params)

    latent, logits = pitch_encoder_forward(em, eq, packed)
    latent = jax.block_until_ready(latent)
    logits = jax.block_until_ready(logits)

    ref_latent, ref_logits = reference_forward(em, eq, params)
    ref_latent = ref_latent.reshape(B, T, OUTPUT_DIM)
    ref_logits = ref_logits.reshape(B, T, PITCH_CLASSES)

    assert latent.shape == (B, T, OUTPUT_DIM)
    assert logits.shape == (B, T, PITCH_CLASSES)
    assert jnp.allclose(logits, ref_logits, atol=1e-2, rtol=1e-2), (
        float(jnp.max(jnp.abs(logits - ref_logits))))
    assert jnp.allclose(latent, ref_latent, atol=1e-2, rtol=1e-2), (
        float(jnp.max(jnp.abs(latent - ref_latent))))

    print("KERNEL_OK")
</pallas_src>

<mosaic_0001>
module attributes {stable_mosaic.version = 11 : i64} {
  func.func @pitch_encoder_kernel(%arg0: i32, %arg1: memref<16x128xbf16, #tpu.memory_space<vmem>>, %arg2: memref<128x256xbf16, #tpu.memory_space<vmem>>, %arg3: memref<4x256x256xbf16, #tpu.memory_space<vmem>>, %arg4: memref<5x256xf32, #tpu.memory_space<vmem>>, %arg5: memref<10x256xf32, #tpu.memory_space<vmem>>, %arg6: memref<256x64xbf16, #tpu.memory_space<vmem>>, %arg7: memref<1x64xf32, #tpu.memory_space<vmem>>, %arg8: memref<3x64x64xbf16, #tpu.memory_space<vmem>>, %arg9: memref<3x64xf32, #tpu.memory_space<vmem>>, %arg10: memref<16x128xf32, #tpu.memory_space<vmem>>) attributes {dimension_semantics = [#tpu.dimension_semantics<parallel>], iteration_bounds = array<i64: 1>, scalar_prefetch = 0 : i64, scratch_operands = 0 : i64, tpu.core_type = #tpu.core_type<tc>, window_params = [{transform_indices = @transform_0, window_bounds = array<i64: 16, 128>}, {pipeline_mode = #tpu.pipeline_mode<synchronous>, transform_indices = @transform_1, window_bounds = array<i64: 128, 256>}, {pipeline_mode = #tpu.pipeline_mode<synchronous>, transform_indices = @transform_2, window_bounds = array<i64: 4, 256, 256>}, {pipeline_mode = #tpu.pipeline_mode<synchronous>, transform_indices = @transform_3, window_bounds = array<i64: 5, 256>}, {pipeline_mode = #tpu.pipeline_mode<synchronous>, transform_indices = @transform_4, window_bounds = array<i64: 10, 256>}, {pipeline_mode = #tpu.pipeline_mode<synchronous>, transform_indices = @transform_5, window_bounds = array<i64: 256, 64>}, {pipeline_mode = #tpu.pipeline_mode<synchronous>, transform_indices = @transform_6, window_bounds = array<i64: 1, 64>}, {pipeline_mode = #tpu.pipeline_mode<synchronous>, transform_indices = @transform_7, window_bounds = array<i64: 3, 64, 64>}, {pipeline_mode = #tpu.pipeline_mode<synchronous>, transform_indices = @transform_8, window_bounds = array<i64: 3, 64>}, {transform_indices = @transform_9, window_bounds = array<i64: 16, 128>}]} {
    %c0 = arith.constant 0 : index
    %c0_0 = arith.constant 0 : index
    %0 = vector.load %arg1[%c0, %c0_0] : memref<16x128xbf16, #tpu.memory_space<vmem>>, vector<16x128xbf16>
    %c0_1 = arith.constant 0 : index
    %c0_2 = arith.constant 0 : index
    %1 = vector.load %arg2[%c0_1, %c0_2] : memref<128x256xbf16, #tpu.memory_space<vmem>>, vector<128x256xbf16>
    %cst = arith.constant dense<0.000000e+00> : vector<16x256xf32>
    %2 = tpu.matmul %0, %1, %cst {dimension_numbers = #tpu.dot_dimension_numbers<[1], [0], [0], [1], [0, 0, 1, 1], [], []>} : vector<16x128xbf16>, vector<128x256xbf16>, vector<16x256xf32> -> vector<16x256xf32>
    %c0_3 = arith.constant 0 : index
    %c0_4 = arith.constant 0 : index
    %3 = vector.load %arg4[%c0_3, %c0_4] : memref<5x256xf32, #tpu.memory_space<vmem>>, vector<1x256xf32>
    %4 = vector.shape_cast %3 : vector<1x256xf32> to vector<256xf32>
    %5 = vector.shape_cast %4 : vector<256xf32> to vector<1x256xf32>
    %6 = vector.broadcast %5 : vector<1x256xf32> to vector<16x256xf32>
    %7 = arith.addf %2, %6 : vector<16x256xf32>
    %cst_5 = arith.constant dense<0.000000e+00> : vector<16xf32>
    %8 = vector.multi_reduction <add>, %7, %cst_5 [1] : vector<16x256xf32> to vector<16xf32>
    %9 = vector.shape_cast %8 : vector<16xf32> to vector<16x1xf32>
    %cst_6 = arith.constant 2.560000e+02 : f32
    %10 = vector.broadcast %cst_6 : f32 to vector<16x1xf32>
    %11 = arith.divf %9, %10 : vector<16x1xf32>
    %12 = vector.broadcast %11 : vector<16x1xf32> to vector<16x256xf32>
    %13 = arith.subf %7, %12 : vector<16x256xf32>
    %14 = arith.mulf %13, %13 : vector<16x256xf32>
    %cst_7 = arith.constant dense<0.000000e+00> : vector<16xf32>
    %15 = vector.multi_reduction <add>, %14, %cst_7 [1] : vector<16x256xf32> to vector<16xf32>
    %16 = vector.shape_cast %15 : vector<16xf32> to vector<16x1xf32>
    %cst_8 = arith.constant 2.560000e+02 : f32
    %17 = vector.broadcast %cst_8 : f32 to vector<16x1xf32>
    %18 = arith.divf %16, %17 : vector<16x1xf32>
    %cst_9 = arith.constant 9.99999974E-6 : f32
    %19 = vector.broadcast %cst_9 : f32 to vector<16x1xf32>
    %20 = arith.addf %18, %19 : vector<16x1xf32>
    %21 = math.rsqrt %20 : vector<16x1xf32>
    %22 = vector.broadcast %21 : vector<16x1xf32> to vector<16x256xf32>
    %23 = arith.mulf %13, %22 : vector<16x256xf32>
    %c0_10 = arith.constant 0 : index
    %c0_11 = arith.constant 0 : index
    %24 = vector.load %arg5[%c0_10, %c0_11] : memref<10x256xf32, #tpu.memory_space<vmem>>, vector<1x256xf32>
    %25 = vector.shape_cast %24 : vector<1x256xf32> to vector<256xf32>
    %c1 = arith.constant 1 : index
    %c0_12 = arith.constant 0 : index
    %26 = vector.load %arg5[%c1, %c0_12] : memref<10x256xf32, #tpu.memory_space<vmem>>, vector<1x256xf32>
    %27 = vector.shape_cast %26 : vector<1x256xf32> to vector<256xf32>
    %28 = arith.truncf %23 : vector<16x256xf32> to vector<16x256xbf16>
    %29 = arith.truncf %25 : vector<256xf32> to vector<256xbf16>
    %30 = vector.shape_cast %29 : vector<256xbf16> to vector<1x256xbf16>
    %31 = vector.broadcast %30 : vector<1x256xbf16> to vector<16x256xbf16>
    %32 = arith.mulf %28, %31 : vector<16x256xbf16>
    %33 = arith.truncf %27 : vector<256xf32> to vector<256xbf16>
    %34 = vector.shape_cast %33 : vector<256xbf16> to vector<1x256xbf16>
    %35 = vector.broadcast %34 : vector<1x256xbf16> to vector<16x256xbf16>
    %36 = arith.addf %32, %35 : vector<16x256xbf16>
    %cst_13 = arith.constant 0.000000e+00 : bf16
    %37 = vector.broadcast %cst_13 : bf16 to vector<16x256xbf16>
    %38 = arith.maximumf %36, %37 : vector<16x256xbf16>
    %c0_14 = arith.constant 0 : index
    %c0_15 = arith.constant 0 : index
    %c0_16 = arith.constant 0 : index
    %39 = vector.load %arg3[%c0_14, %c0_15, %c0_16] : memref<4x256x256xbf16, #tpu.memory_space<vmem>>, vector<1x256x256xbf16>
    %40 = vector.shape_cast %39 : vector<1x256x256xbf16> to vector<256x256xbf16>
    %cst_17 = arith.constant dense<0.000000e+00> : vector<16x256xf32>
    %41 = tpu.matmul %38, %40, %cst_17 {dimension_numbers = #tpu.dot_dimension_numbers<[1], [0], [0], [1], [0, 0, 1, 1], [], []>} : vector<16x256xbf16>, vector<256x256xbf16>, vector<16x256xf32> -> vector<16x256xf32>
    %c1_18 = arith.constant 1 : index
    %c0_19 = arith.constant 0 : index
    %42 = vector.load %arg4[%c1_18, %c0_19] : memref<5x256xf32, #tpu.memory_space<vmem>>, vector<1x256xf32>
    %43 = vector.shape_cast %42 : vector<1x256xf32> to vector<256xf32>
    %44 = vector.shape_cast %43 : vector<256xf32> to vector<1x256xf32>
    %45 = vector.broadcast %44 : vector<1x256xf32> to vector<16x256xf32>
    %46 = arith.addf %41, %45 : vector<16x256xf32>
    %cst_20 = arith.constant dense<0.000000e+00> : vector<16xf32>
    %47 = vector.multi_reduction <add>, %46, %cst_20 [1] : vector<16x256xf32> to vector<16xf32>
    %48 = vector.shape_cast %47 : vector<16xf32> to vector<16x1xf32>
    %cst_21 = arith.constant 2.560000e+02 : f32
    %49 = vector.broadcast %cst_21 : f32 to vector<16x1xf32>
    %50 = arith.divf %48, %49 : vector<16x1xf32>
    %51 = vector.broadcast %50 : vector<16x1xf32> to vector<16x256xf32>
    %52 = arith.subf %46, %51 : vector<16x256xf32>
    %53 = arith.mulf %52, %52 : vector<16x256xf32>
    %cst_22 = arith.constant dense<0.000000e+00> : vector<16xf32>
    %54 = vector.multi_reduction <add>, %53, %cst_22 [1] : vector<16x256xf32> to vector<16xf32>
    %55 = vector.shape_cast %54 : vector<16xf32> to vector<16x1xf32>
    %cst_23 = arith.constant 2.560000e+02 : f32
    %56 = vector.broadcast %cst_23 : f32 to vector<16x1xf32>
    %57 = arith.divf %55, %56 : vector<16x1xf32>
    %cst_24 = arith.constant 9.99999974E-6 : f32
    %58 = vector.broadcast %cst_24 : f32 to vector<16x1xf32>
    %59 = arith.addf %57, %58 : vector<16x1xf32>
    %60 = math.rsqrt %59 : vector<16x1xf32>
    %61 = vector.broadcast %60 : vector<16x1xf32> to vector<16x256xf32>
    %62 = arith.mulf %52, %61 : vector<16x256xf32>
    %c2 = arith.constant 2 : index
    %c0_25 = arith.constant 0 : index
    %63 = vector.load %arg5[%c2, %c0_25] : memref<10x256xf32, #tpu.memory_space<vmem>>, vector<1x256xf32>
    %64 = vector.shape_cast %63 : vector<1x256xf32> to vector<256xf32>
    %c3 = arith.constant 3 : index
    %c0_26 = arith.constant 0 : index
    %65 = vector.load %arg5[%c3, %c0_26] : memref<10x256xf32, #tpu.memory_space<vmem>>, vector<1x256xf32>
    %66 = vector.shape_cast %65 : vector<1x256xf32> to vector<256xf32>
    %67 = arith.truncf %62 : vector<16x256xf32> to vector<16x256xbf16>
    %68 = arith.truncf %64 : vector<256xf32> to vector<256xbf16>
    %69 = vector.shape_cast %68 : vector<256xbf16> to vector<1x256xbf16>
    %70 = vector.broadcast %69 : vector<1x256xbf16> to vector<16x256xbf16>
    %71 = arith.mulf %67, %70 : vector<16x256xbf16>
    %72 = arith.truncf %66 : vector<256xf32> to vector<256xbf16>
    %73 = vector.shape_cast %72 : vector<256xbf16> to vector<1x256xbf16>
    %74 = vector.broadcast %73 : vector<1x256xbf16> to vector<16x256xbf16>
    %75 = arith.addf %71, %74 : vector<16x256xbf16>
    %cst_27 = arith.constant 0.000000e+00 : bf16
    %76 = vector.broadcast %cst_27 : bf16 to vector<16x256xbf16>
    %77 = arith.maximumf %75, %76 : vector<16x256xbf16>
    %c1_28 = arith.constant 1 : index
    %c0_29 = arith.constant 0 : index
    %c0_30 = arith.constant 0 : index
    %78 = vector.load %arg3[%c1_28, %c0_29, %c0_30] : memref<4x256x256xbf16, #tpu.memory_space<vmem>>, vector<1x256x256xbf16>
    %79 = vector.shape_cast %78 : vector<1x256x256xbf16> to vector<256x256xbf16>
    %cst_31 = arith.constant dense<0.000000e+00> : vector<16x256xf32>
    %80 = tpu.matmul %77, %79, %cst_31 {dimension_numbers = #tpu.dot_dimension_numbers<[1], [0], [0], [1], [0, 0, 1, 1], [], []>} : vector<16x256xbf16>, vector<256x256xbf16>, vector<16x256xf32> -> vector<16x256xf32>
    %c2_32 = arith.constant 2 : index
    %c0_33 = arith.constant 0 : index
    %81 = vector.load %arg4[%c2_32, %c0_33] : memref<5x256xf32, #tpu.memory_space<vmem>>, vector<1x256xf32>
    %82 = vector.shape_cast %81 : vector<1x256xf32> to vector<256xf32>
    %83 = vector.shape_cast %82 : vector<256xf32> to vector<1x256xf32>
    %84 = vector.broadcast %83 : vector<1x256xf32> to vector<16x256xf32>
    %85 = arith.addf %80, %84 : vector<16x256xf32>
    %cst_34 = arith.constant dense<0.000000e+00> : vector<16xf32>
    %86 = vector.multi_reduction <add>, %85, %cst_34 [1] : vector<16x256xf32> to vector<16xf32>
    %87 = vector.shape_cast %86 : vector<16xf32> to vector<16x1xf32>
    %cst_35 = arith.constant 2.560000e+02 : f32
    %88 = vector.broadcast %cst_35 : f32 to vector<16x1xf32>
    %89 = arith.divf %87, %88 : vector<16x1xf32>
    %90 = vector.broadcast %89 : vector<16x1xf32> to vector<16x256xf32>
    %91 = arith.subf %85, %90 : vector<16x256xf32>
    %92 = arith.mulf %91, %91 : vector<16x256xf32>
    %cst_36 = arith.constant dense<0.000000e+00> : vector<16xf32>
    %93 = vector.multi_reduction <add>, %92, %cst_36 [1] : vector<16x256xf32> to vector<16xf32>
    %94 = vector.shape_cast %93 : vector<16xf32> to vector<16x1xf32>
    %cst_37 = arith.constant 2.560000e+02 : f32
    %95 = vector.broadcast %cst_37 : f32 to vector<16x1xf32>
    %96 = arith.divf %94, %95 : vector<16x1xf32>
    %cst_38 = arith.constant 9.99999974E-6 : f32
    %97 = vector.broadcast %cst_38 : f32 to vector<16x1xf32>
    %98 = arith.addf %96, %97 : vector<16x1xf32>
    %99 = math.rsqrt %98 : vector<16x1xf32>
    %100 = vector.broadcast %99 : vector<16x1xf32> to vector<16x256xf32>
    %101 = arith.mulf %91, %100 : vector<16x256xf32>
    %c4 = arith.constant 4 : index
    %c0_39 = arith.constant 0 : index
    %102 = vector.load %arg5[%c4, %c0_39] : memref<10x256xf32, #tpu.memory_space<vmem>>, vector<1x256xf32>
    %103 = vector.shape_cast %102 : vector<1x256xf32> to vector<256xf32>
    %c5 = arith.constant 5 : index
    %c0_40 = arith.constant 0 : index
    %104 = vector.load %arg5[%c5, %c0_40] : memref<10x256xf32, #tpu.memory_space<vmem>>, vector<1x256xf32>
    %105 = vector.shape_cast %104 : vector<1x256xf32> to vector<256xf32>
    %106 = arith.truncf %101 : vector<16x256xf32> to vector<16x256xbf16>
    %107 = arith.truncf %103 : vector<256xf32> to vector<256xbf16>
    %108 = vector.shape_cast %107 : vector<256xbf16> to vector<1x256xbf16>
    %109 = vector.broadcast %108 : vector<1x256xbf16> to vector<16x256xbf16>
    %110 = arith.mulf %106, %109 : vector<16x256xbf16>
    %111 = arith.truncf %105 : vector<256xf32> to vector<256xbf16>
    %112 = vector.shape_cast %111 : vector<256xbf16> to vector<1x256xbf16>
    %113 = vector.broadcast %112 : vector<1x256xbf16> to vector<16x256xbf16>
    %114 = arith.addf %110, %113 : vector<16x256xbf16>
    %cst_41 = arith.constant 0.000000e+00 : bf16
    %115 = vector.broadcast %cst_41 : bf16 to vector<16x256xbf16>
    %116 = arith.maximumf %114, %115 : vector<16x256xbf16>
    %c2_42 = arith.constant 2 : index
    %c0_43 = arith.constant 0 : index
    %c0_44 = arith.constant 0 : index
    %117 = vector.load %arg3[%c2_42, %c0_43, %c0_44] : memref<4x256x256xbf16, #tpu.memory_space<vmem>>, vector<1x256x256xbf16>
    %118 = vector.shape_cast %117 : vector<1x256x256xbf16> to vector<256x256xbf16>
    %cst_45 = arith.constant dense<0.000000e+00> : vector<16x256xf32>
    %119 = tpu.matmul %116, %118, %cst_45 {dimension_numbers = #tpu.dot_dimension_numbers<[1], [0], [0], [1], [0, 0, 1, 1], [], []>} : vector<16x256xbf16>, vector<256x256xbf16>, vector<16x256xf32> -> vector<16x256xf32>
    %c3_46 = arith.constant 3 : index
    %c0_47 = arith.constant 0 : index
    %120 = vector.load %arg4[%c3_46, %c0_47] : memref<5x256xf32, #tpu.memory_space<vmem>>, vector<1x256xf32>
    %121 = vector.shape_cast %120 : vector<1x256xf32> to vector<256xf32>
    %122 = vector.shape_cast %121 : vector<256xf32> to vector<1x256xf32>
    %123 = vector.broadcast %122 : vector<1x256xf32> to vector<16x256xf32>
    %124 = arith.addf %119, %123 : vector<16x256xf32>
    %cst_48 = arith.constant dense<0.000000e+00> : vector<16xf32>
    %125 = vector.multi_reduction <add>, %124, %cst_48 [1] : vector<16x256xf32> to vector<16xf32>
    %126 = vector.shape_cast %125 : vector<16xf32> to vector<16x1xf32>
    %cst_49 = arith.constant 2.560000e+02 : f32
    %127 = vector.broadcast %cst_49 : f32 to vector<16x1xf32>
    %128 = arith.divf %126, %127 : vector<16x1xf32>
    %129 = vector.broadcast %128 : vector<16x1xf32> to vector<16x256xf32>
    %130 = arith.subf %124, %129 : vector<16x256xf32>
    %131 = arith.mulf %130, %130 : vector<16x256xf32>
    %cst_50 = arith.constant dense<0.000000e+00> : vector<16xf32>
    %132 = vector.multi_reduction <add>, %131, %cst_50 [1] : vector<16x256xf32> to vector<16xf32>
    %133 = vector.shape_cast %132 : vector<16xf32> to vector<16x1xf32>
    %cst_51 = arith.constant 2.560000e+02 : f32
    %134 = vector.broadcast %cst_51 : f32 to vector<16x1xf32>
    %135 = arith.divf %133, %134 : vector<16x1xf32>
    %cst_52 = arith.constant 9.99999974E-6 : f32
    %136 = vector.broadcast %cst_52 : f32 to vector<16x1xf32>
    %137 = arith.addf %135, %136 : vector<16x1xf32>
    %138 = math.rsqrt %137 : vector<16x1xf32>
    %139 = vector.broadcast %138 : vector<16x1xf32> to vector<16x256xf32>
    %140 = arith.mulf %130, %139 : vector<16x256xf32>
    %c6 = arith.constant 6 : index
    %c0_53 = arith.constant 0 : index
    %141 = vector.load %arg5[%c6, %c0_53] : memref<10x256xf32, #tpu.memory_space<vmem>>, vector<1x256xf32>
    %142 = vector.shape_cast %141 : vector<1x256xf32> to vector<256xf32>
    %c7 = arith.constant 7 : index
    %c0_54 = arith.constant 0 : index
    %143 = vector.load %arg5[%c7, %c0_54] : memref<10x256xf32, #tpu.memory_space<vmem>>, vector<1x256xf32>
    %144 = vector.shape_cast %143 : vector<1x256xf32> to vector<256xf32>
    %145 = arith.truncf %140 : vector<16x256xf32> to vector<16x256xbf16>
    %146 = arith.truncf %142 : vector<256xf32> to vector<256xbf16>
    %147 = vector.shape_cast %146 : vector<256xbf16> to vector<1x256xbf16>
    %148 = vector.broadcast %147 : vector<1x256xbf16> to vector<16x256xbf16>
    %149 = arith.mulf %145, %148 : vector<16x256xbf16>
    %150 = arith.truncf %144 : vector<256xf32> to vector<256xbf16>
    %151 = vector.shape_cast %150 : vector<256xbf16> to vector<1x256xbf16>
    %152 = vector.broadcast %151 : vector<1x256xbf16> to vector<16x256xbf16>
    %153 = arith.addf %149, %152 : vector<16x256xbf16>
    %cst_55 = arith.constant 0.000000e+00 : bf16
    %154 = vector.broadcast %cst_55 : bf16 to vector<16x256xbf16>
    %155 = arith.maximumf %153, %154 : vector<16x256xbf16>
    %c3_56 = arith.constant 3 : index
    %c0_57 = arith.constant 0 : index
    %c0_58 = arith.constant 0 : index
    %156 = vector.load %arg3[%c3_56, %c0_57, %c0_58] : memref<4x256x256xbf16, #tpu.memory_space<vmem>>, vector<1x256x256xbf16>
    %157 = vector.shape_cast %156 : vector<1x256x256xbf16> to vector<256x256xbf16>
    %cst_59 = arith.constant dense<0.000000e+00> : vector<16x256xf32>
    %158 = tpu.matmul %155, %157, %cst_59 {dimension_numbers = #tpu.dot_dimension_numbers<[1], [0], [0], [1], [0, 0, 1, 1], [], []>} : vector<16x256xbf16>, vector<256x256xbf16>, vector<16x256xf32> -> vector<16x256xf32>
    %c4_60 = arith.constant 4 : index
    %c0_61 = arith.constant 0 : index
    %159 = vector.load %arg4[%c4_60, %c0_61] : memref<5x256xf32, #tpu.memory_space<vmem>>, vector<1x256xf32>
    %160 = vector.shape_cast %159 : vector<1x256xf32> to vector<256xf32>
    %161 = vector.shape_cast %160 : vector<256xf32> to vector<1x256xf32>
    %162 = vector.broadcast %161 : vector<1x256xf32> to vector<16x256xf32>
    %163 = arith.addf %158, %162 : vector<16x256xf32>
    %cst_62 = arith.constant dense<0.000000e+00> : vector<16xf32>
    %164 = vector.multi_reduction <add>, %163, %cst_62 [1] : vector<16x256xf32> to vector<16xf32>
    %165 = vector.shape_cast %164 : vector<16xf32> to vector<16x1xf32>
    %cst_63 = arith.constant 2.560000e+02 : f32
    %166 = vector.broadcast %cst_63 : f32 to vector<16x1xf32>
    %167 = arith.divf %165, %166 : vector<16x1xf32>
    %168 = vector.broadcast %167 : vector<16x1xf32> to vector<16x256xf32>
    %169 = arith.subf %163, %168 : vector<16x256xf32>
    %170 = arith.mulf %169, %169 : vector<16x256xf32>
    %cst_64 = arith.constant dense<0.000000e+00> : vector<16xf32>
    %171 = vector.multi_reduction <add>, %170, %cst_64 [1] : vector<16x256xf32> to vector<16xf32>
    %172 = vector.shape_cast %171 : vector<16xf32> to vector<16x1xf32>
    %cst_65 = arith.constant 2.560000e+02 : f32
    %173 = vector.broadcast %cst_65 : f32 to vector<16x1xf32>
    %174 = arith.divf %172, %173 : vector<16x1xf32>
    %cst_66 = arith.constant 9.99999974E-6 : f32
    %175 = vector.broadcast %cst_66 : f32 to vector<16x1xf32>
    %176 = arith.addf %174, %175 : vector<16x1xf32>
    %177 = math.rsqrt %176 : vector<16x1xf32>
    %178 = vector.broadcast %177 : vector<16x1xf32> to vector<16x256xf32>
    %179 = arith.mulf %169, %178 : vector<16x256xf32>
    %c8 = arith.constant 8 : index
    %c0_67 = arith.constant 0 : index
    %180 = vector.load %arg5[%c8, %c0_67] : memref<10x256xf32, #tpu.memory_space<vmem>>, vector<1x256xf32>
    %181 = vector.shape_cast %180 : vector<1x256xf32> to vector<256xf32>
    %c9 = arith.constant 9 : index
    %c0_68 = arith.constant 0 : index
    %182 = vector.load %arg5[%c9, %c0_68] : memref<10x256xf32, #tpu.memory_space<vmem>>, vector<1x256xf32>
    %183 = vector.shape_cast %182 : vector<1x256xf32> to vector<256xf32>
    %184 = arith.truncf %179 : vector<16x256xf32> to vector<16x256xbf16>
    %185 = arith.truncf %181 : vector<256xf32> to vector<256xbf16>
    %186 = vector.shape_cast %185 : vector<256xbf16> to vector<1x256xbf16>
    %187 = vector.broadcast %186 : vector<1x256xbf16> to vector<16x256xbf16>
    %188 = arith.mulf %184, %187 : vector<16x256xbf16>
    %189 = arith.truncf %183 : vector<256xf32> to vector<256xbf16>
    %190 = vector.shape_cast %189 : vector<256xbf16> to vector<1x256xbf16>
    %191 = vector.broadcast %190 : vector<1x256xbf16> to vector<16x256xbf16>
    %192 = arith.addf %188, %191 : vector<16x256xbf16>
    %cst_69 = arith.constant 0.000000e+00 : bf16
    %193 = vector.broadcast %cst_69 : bf16 to vector<16x256xbf16>
    %194 = arith.maximumf %192, %193 : vector<16x256xbf16>
    %c0_70 = arith.constant 0 : index
    %c0_71 = arith.constant 0 : index
    %195 = vector.load %arg6[%c0_70, %c0_71] : memref<256x64xbf16, #tpu.memory_space<vmem>>, vector<256x64xbf16>
    %cst_72 = arith.constant dense<0.000000e+00> : vector<16x64xf32>
    %196 = tpu.matmul %194, %195, %cst_72 {dimension_numbers = #tpu.dot_dimension_numbers<[1], [0], [0], [1], [0, 0, 1, 1], [], []>} : vector<16x256xbf16>, vector<256x64xbf16>, vector<16x64xf32> -> vector<16x64xf32>
    %c0_73 = arith.constant 0 : index
    %c0_74 = arith.constant 0 : index
    %197 = vector.load %arg7[%c0_73, %c0_74] : memref<1x64xf32, #tpu.memory_space<vmem>>, vector<1x64xf32>
    %198 = vector.broadcast %197 : vector<1x64xf32> to vector<16x64xf32>
    %199 = arith.addf %196, %198 : vector<16x64xf32>
    %cst_75 = arith.constant 0.000000e+00 : f32
    %200 = vector.broadcast %cst_75 : f32 to vector<16x64xf32>
    %201 = arith.cmpf ogt, %199, %200 : vector<16x64xf32>
    %202 = arith.extui %201 : vector<16x64xi1> to vector<16x64xi32>
    %203 = arith.sitofp %202 : vector<16x64xi32> to vector<16x64xf32>
    %204 = arith.truncf %203 : vector<16x64xf32> to vector<16x64xbf16>
    %c0_76 = arith.constant 0 : index
    %c0_77 = arith.constant 0 : index
    %c0_78 = arith.constant 0 : index
    %205 = vector.load %arg8[%c0_76, %c0_77, %c0_78] : memref<3x64x64xbf16, #tpu.memory_space<vmem>>, vector<1x64x64xbf16>
    %206 = vector.shape_cast %205 : vector<1x64x64xbf16> to vector<64x64xbf16>
    %cst_79 = arith.constant dense<0.000000e+00> : vector<16x64xf32>
    %207 = tpu.matmul %204, %206, %cst_79 {dimension_numbers = #tpu.dot_dimension_numbers<[1], [0], [0], [1], [0, 0, 1, 1], [], []>} : vector<16x64xbf16>, vector<64x64xbf16>, vector<16x64xf32> -> vector<16x64xf32>
    %c0_80 = arith.constant 0 : index
    %c0_81 = arith.constant 0 : index
    %208 = vector.load %arg9[%c0_80, %c0_81] : memref<3x64xf32, #tpu.memory_space<vmem>>, vector<1x64xf32>
    %209 = vector.shape_cast %208 : vector<1x64xf32> to vector<64xf32>
    %210 = vector.shape_cast %209 : vector<64xf32> to vector<1x64xf32>
    %211 = vector.broadcast %210 : vector<1x64xf32> to vector<16x64xf32>
    %212 = arith.addf %207, %211 : vector<16x64xf32>
    %cst_82 = arith.constant 0.000000e+00 : f32
    %213 = vector.broadcast %cst_82 : f32 to vector<16x64xf32>
    %214 = arith.maximumf %212, %213 : vector<16x64xf32>
    %215 = arith.truncf %214 : vector<16x64xf32> to vector<16x64xbf16>
    %c1_83 = arith.constant 1 : index
    %c0_84 = arith.constant 0 : index
    %c0_85 = arith.constant 0 : index
    %216 = vector.load %arg8[%c1_83, %c0_84, %c0_85] : memref<3x64x64xbf16, #tpu.memory_space<vmem>>, vector<1x64x64xbf16>
    %217 = vector.shape_cast %216 : vector<1x64x64xbf16> to vector<64x64xbf16>
    %cst_86 = arith.constant dense<0.000000e+00> : vector<16x64xf32>
    %218 = tpu.matmul %215, %217, %cst_86 {dimension_numbers = #tpu.dot_dimension_numbers<[1], [0], [0], [1], [0, 0, 1, 1], [], []>} : vector<16x64xbf16>, vector<64x64xbf16>, vector<16x64xf32> -> vector<16x64xf32>
    %c1_87 = arith.constant 1 : index
    %c0_88 = arith.constant 0 : index
    %219 = vector.load %arg9[%c1_87, %c0_88] : memref<3x64xf32, #tpu.memory_space<vmem>>, vector<1x64xf32>
    %220 = vector.shape_cast %219 : vector<1x64xf32> to vector<64xf32>
    %221 = vector.shape_cast %220 : vector<64xf32> to vector<1x64xf32>
    %222 = vector.broadcast %221 : vector<1x64xf32> to vector<16x64xf32>
    %223 = arith.addf %218, %222 : vector<16x64xf32>
    %cst_89 = arith.constant 0.000000e+00 : f32
    %224 = vector.broadcast %cst_89 : f32 to vector<16x64xf32>
    %225 = arith.maximumf %223, %224 : vector<16x64xf32>
    %226 = arith.truncf %225 : vector<16x64xf32> to vector<16x64xbf16>
    %c2_90 = arith.constant 2 : index
    %c0_91 = arith.constant 0 : index
    %c0_92 = arith.constant 0 : index
    %227 = vector.load %arg8[%c2_90, %c0_91, %c0_92] : memref<3x64x64xbf16, #tpu.memory_space<vmem>>, vector<1x64x64xbf16>
    %228 = vector.shape_cast %227 : vector<1x64x64xbf16> to vector<64x64xbf16>
    %cst_93 = arith.constant dense<0.000000e+00> : vector<16x64xf32>
    %229 = tpu.matmul %226, %228, %cst_93 {dimension_numbers = #tpu.dot_dimension_numbers<[1], [0], [0], [1], [0, 0, 1, 1], [], []>} : vector<16x64xbf16>, vector<64x64xbf16>, vector<16x64xf32> -> vector<16x64xf32>
    %c2_94 = arith.constant 2 : index
    %c0_95 = arith.constant 0 : index
    %230 = vector.load %arg9[%c2_94, %c0_95] : memref<3x64xf32, #tpu.memory_space<vmem>>, vector<1x64xf32>
    %231 = vector.shape_cast %230 : vector<1x64xf32> to vector<64xf32>
    %232 = vector.shape_cast %231 : vector<64xf32> to vector<1x64xf32>
    %233 = vector.broadcast %232 : vector<1x64xf32> to vector<16x64xf32>
    %234 = arith.addf %229, %233 : vector<16x64xf32>
    %c0_96 = arith.constant 0 : index
    %c0_97 = arith.constant 0 : index
    %235 = vector.load %arg10[%c0_96, %c0_97] : memref<16x128xf32, #tpu.memory_space<vmem>>, vector<16x64xf32>
    tpu.vector_store %arg10[%c0_96, %c0_97], %234 {strides = array<i32>} : memref<16x128xf32, #tpu.memory_space<vmem>>, vector<16x64xf32>,
    %c0_98 = arith.constant 0 : index
    %c64 = arith.constant 64 : index
    %236 = vector.load %arg10[%c0_98, %c64] : memref<16x128xf32, #tpu.memory_space<vmem>>, vector<16x64xf32>
    tpu.vector_store %arg10[%c0_98, %c64], %199 {strides = array<i32>} : memref<16x128xf32, #tpu.memory_space<vmem>>, vector<16x64xf32>,
    return
  }
  func.func @transform_0(%arg0: i32) -> (i32, i32) {
    %c0_i32 = arith.constant 0 : i32
    %c0_i32_0 = arith.constant 0 : i32
    return %arg0, %c0_i32 : i32, i32
  }
  func.func @transform_1(%arg0: i32) -> (i32, i32) {
    %c0_i32 = arith.constant 0 : i32
    %c0_i32_0 = arith.constant 0 : i32
    %c0_i32_1 = arith.constant 0 : i32
    return %c0_i32, %c0_i32_0 : i32, i32
  }
  func.func @transform_2(%arg0: i32) -> (i32, i32, i32) {
    %c0_i32 = arith.constant 0 : i32
    %c0_i32_0 = arith.constant 0 : i32
    %c0_i32_1 = arith.constant 0 : i32
    %c0_i32_2 = arith.constant 0 : i32
    return %c0_i32, %c0_i32_0, %c0_i32_1 : i32, i32, i32
  }
  func.func @transform_3(%arg0: i32) -> (i32, i32) {
    %c0_i32 = arith.constant 0 : i32
    %c0_i32_0 = arith.constant 0 : i32
    %c0_i32_1 = arith.constant 0 : i32
    return %c0_i32, %c0_i32_0 : i32, i32
  }
  func.func @transform_4(%arg0: i32) -> (i32, i32) {
    %c0_i32 = arith.constant 0 : i32
    %c0_i32_0 = arith.constant 0 : i32
    %c0_i32_1 = arith.constant 0 : i32
    return %c0_i32, %c0_i32_0 : i32, i32
  }
  func.func @transform_5(%arg0: i32) -> (i32, i32) {
    %c0_i32 = arith.constant 0 : i32
    %c0_i32_0 = arith.constant 0 : i32
    %c0_i32_1 = arith.constant 0 : i32
    return %c0_i32, %c0_i32_0 : i32, i32
  }
  func.func @transform_6(%arg0: i32) -> (i32, i32) {
    %c0_i32 = arith.constant 0 : i32
    %c0_i32_0 = arith.constant 0 : i32
    %c0_i32_1 = arith.constant 0 : i32
    return %c0_i32, %c0_i32_0 : i32, i32
  }
  func.func @transform_7(%arg0: i32) -> (i32, i32, i32) {
    %c0_i32 = arith.constant 0 : i32
    %c0_i32_0 = arith.constant 0 : i32
    %c0_i32_1 = arith.constant 0 : i32
    %c0_i32_2 = arith.constant 0 : i32
    return %c0_i32, %c0_i32_0, %c0_i32_1 : i32, i32, i32
  }
  func.func @transform_8(%arg0: i32) -> (i32, i32) {
    %c0_i32 = arith.constant 0 : i32
    %c0_i32_0 = arith.constant 0 : i32
    %c0_i32_1 = arith.constant 0 : i32
    return %c0_i32, %c0_i32_0 : i32, i32
  }
  func.func @transform_9(%arg0: i32) -> (i32, i32) {
    %c0_i32 = arith.constant 0 : i32
    %c0_i32_0 = arith.constant 0 : i32
    return %arg0, %c0_i32 : i32, i32
  }
}

</mosaic_0001>

<llo_original>
// kernel: pitch_encoder_forward.1
$region0: #{pitch_encoder_forward.1}
  #allocation0 [shape = 'u32[]', space=smem, size = 0x4, offset = 0x4, fixed_abs, tag = 'smem constant byte address 0x4 - core index']
  #allocation1 [shape = 'u32[72,128]{1,0:T(1,128)}', space=vmem, size = 0x9000, scoped, tag = 'internal scratch']
  %s0 = inlined_call_operand.vmem [shape: bf16[16,128], index: 0, kind: input, shape index: {}]
  %s1 = inlined_call_operand.vmem [shape: bf16[128,256], index: 1, kind: input, shape index: {}]
  %s2 = inlined_call_operand.hbm [shape: bf16[4,256,256], index: 2, kind: input, shape index: {}]
  %s3 = inlined_call_operand.hbm [shape: f32[5,256], index: 3, kind: input, shape index: {}]
  %s4 = inlined_call_operand.vmem [shape: f32[10,256], index: 4, kind: input, shape index: {}]
  %s5 = inlined_call_operand.vmem [shape: bf16[256,64], index: 5, kind: input, shape index: {}]
  %s6 = inlined_call_operand.vmem [shape: f32[1,64], index: 6, kind: input, shape index: {}]
  %s7 = inlined_call_operand.vmem [shape: bf16[3,64,64], index: 7, kind: input, shape index: {}]
  %s8 = inlined_call_operand.vmem [shape: f32[3,64], index: 8, kind: input, shape index: {}]
  %s9 = inlined_call_operand.vmem [shape: f32[16,128], index: 9, kind: output, shape index: {}]
  %s10 = sld [smem:[#allocation0]]
  $region54: #{pitch_encoder_forward.1} parent=0
    _
  %s12 = ssub.s32 1, %s10
  %s13 = scalar_select 0, %s12, %s10
  $region1: #{pitch_encoder_forward.1} parent=0
    #allocation2 [shape = 'u8[524288]{0}', space=vmem, size = 0x80000, scoped, tag = 'input window, operand 2, single buffered']
    #allocation3 [shape = 's32[1]{0}', space=sflag, size = 0x4, scoped, tag = 'scoped memory for pitch_encoder_forward.1']
    #allocation4 [shape = 'u8[8192]{0}', space=vmem, size = 0x2000, scoped, tag = 'input window, operand 3, single buffered']
    #allocation5 [shape = 's32[1]{0}', space=sflag, size = 0x4, scoped, tag = 'scoped memory for pitch_encoder_forward.1']
    %14 = vsyncpa [#allocation3], 0
    %15 = vsyncpa [#allocation5], 0
    // Predicated region
    $region2: #{pitch_encoder_forward.1} parent=1 // pred_check
      _
    $region3: #{pitch_encoder_forward.1} parent=1 // pred_check_branch
      %17 = sbr.rel (0) target = $region5
    $region4: #{pitch_encoder_forward.1} parent=1 // pred_region
      _
    $region5: #{pitch_encoder_forward.1} parent=1 // pred_fallthru
      _
    // Predicated region
    $region6: #{pitch_encoder_forward.1} parent=1 // pred_check
      _
    $region7: #{pitch_encoder_forward.1} parent=1 // pred_check_branch
      %19 = sbr.rel (0) target = $region9
    $region8: #{pitch_encoder_forward.1} parent=1 // pred_region
      _
    $region9: #{pitch_encoder_forward.1} parent=1 // pred_fallthru
      _
    // Predicated region
    $region10: #{pitch_encoder_forward.1} parent=1 // pred_check
      _
    $region11: #{pitch_encoder_forward.1} parent=1 // pred_check_branch
      %21 = sbr.rel (0) target = $region13
    $region12: #{pitch_encoder_forward.1} parent=1 // pred_region
      %23 = vsyncadd [#allocation3], 0
      %s24 = sshll.u32 %s2, 4
      %s25 = int_to_ptr.hbm [resolvable:$true] %s24
      %s26 = sshll.u32 [#allocation2], 4
      %s27 = int_to_ptr.vmem [resolvable:$true] %s26
      %32 = dma.hbm_to_vmem [thread:$0]  %s25, 16384, %s27, [#allocation3], 128, 128, 8
    $region13: #{pitch_encoder_forward.1} parent=1 // pred_fallthru
      _
    // Predicated region
    $region14: #{pitch_encoder_forward.1} parent=1 // pred_check
      _
    $region15: #{pitch_encoder_forward.1} parent=1 // pred_check_branch
      %34 = sbr.rel (0) target = $region17
    $region16: #{pitch_encoder_forward.1} parent=1 // pred_region
      %36 = vsyncadd [#allocation5], 0
      %s38 = sshll.u32 %s3, 4
      %s39 = int_to_ptr.hbm [resolvable:$true] %s38
      %s40 = sshll.u32 [#allocation4], 4
      %s41 = int_to_ptr.vmem [resolvable:$true] %s40
      %43 = dma.hbm_to_vmem [thread:$0]  %s39, 256, %s41, [#allocation5]
    $region17: #{pitch_encoder_forward.1} parent=1 // pred_fallthru
      _
    // Predicated region
    $region18: #{pitch_encoder_forward.1} parent=1 // pred_check
      _
    $region19: #{pitch_encoder_forward.1} parent=1 // pred_check_branch
      %45 = sbr.rel (0) target = $region21
    $region20: #{pitch_encoder_forward.1} parent=1 // pred_region
      _
    $region21: #{pitch_encoder_forward.1} parent=1 // pred_fallthru
      _
    // Predicated region
    $region22: #{pitch_encoder_forward.1} parent=1 // pred_check
      _
    $region23: #{pitch_encoder_forward.1} parent=1 // pred_check_branch
      %47 = sbr.rel (0) target = $region25
    $region24: #{pitch_encoder_forward.1} parent=1 // pred_region
      _
    $region25: #{pitch_encoder_forward.1} parent=1 // pred_fallthru
      _
    // Predicated region
    $region26: #{pitch_encoder_forward.1} parent=1 // pred_check
      _
    $region27: #{pitch_encoder_forward.1} parent=1 // pred_check_branch
      %49 = sbr.rel (0) target = $region29
    $region28: #{pitch_encoder_forward.1} parent=1 // pred_region
      _
    $region29: #{pitch_encoder_forward.1} parent=1 // pred_fallthru
      _
    // Predicated region
    $region30: #{pitch_encoder_forward.1} parent=1 // pred_check
      _
    $region31: #{pitch_encoder_forward.1} parent=1 // pred_check_branch
      %51 = sbr.rel (0) target = $region33
    $region32: #{pitch_encoder_forward.1} parent=1 // pred_region
      _
    $region33: #{pitch_encoder_forward.1} parent=1 // pred_fallthru
      _
    // Predicated region
    $region34: #{pitch_encoder_forward.1} parent=1 // pred_check
      _
    $region35: #{pitch_encoder_forward.1} parent=1 // pred_check_branch
      %53 = sbr.rel (0) target = $region37
    $region36: #{pitch_encoder_forward.1} parent=1 // pred_region
      _
    $region37: #{pitch_encoder_forward.1} parent=1 // pred_fallthru
      _
    // Predicated region
    $region38: #{pitch_encoder_forward.1} parent=1 // pred_check
      _
    $region39: #{pitch_encoder_forward.1} parent=1 // pred_check_branch
      %55 = sbr.rel (0) target = $region41
    $region40: #{pitch_encoder_forward.1} parent=1 // pred_region
      %57 = dma.done [#allocation3], 16384
    $region41: #{pitch_encoder_forward.1} parent=1 // pred_fallthru
      _
    // Predicated region
    $region42: #{pitch_encoder_forward.1} parent=1 // pred_check
      _
    $region43: #{pitch_encoder_forward.1} parent=1 // pred_check_branch
      %59 = sbr.rel (0) target = $region45
    $region44: #{pitch_encoder_forward.1} parent=1 // pred_region
      %61 = dma.done [#allocation5], 256
    $region45: #{pitch_encoder_forward.1} parent=1 // pred_fallthru
      _
    %v63 = vld [vmem:[%s0] sm:$0xf]
    %v64 = vld [vmem:[%s0 + $0x4] sm:$0xf]
    %v65 = vld [vmem:[%s1] sm:$0xff]
    %v66 = vld [vmem:[%s1 + $0x8] sm:$0xff]
    %v67 = vld [vmem:[%s1 + $0x10] sm:$0xff]
    %v68 = vld [vmem:[%s1 + $0x18] sm:$0xff]
    %v69 = vld [vmem:[%s1 + $0x20] sm:$0xff]
    %v70 = vld [vmem:[%s1 + $0x28] sm:$0xff]
    %v71 = vld [vmem:[%s1 + $0x30] sm:$0xff]
    %v72 = vld [vmem:[%s1 + $0x38] sm:$0xff]
    %v73 = vld [vmem:[%s1 + $0x40] sm:$0xff]
    %v74 = vld [vmem:[%s1 + $0x48] sm:$0xff]
    %v75 = vld [vmem:[%s1 + $0x50] sm:$0xff]
    %v76 = vld [vmem:[%s1 + $0x58] sm:$0xff]
    %v77 = vld [vmem:[%s1 + $0x60] sm:$0xff]
    %v78 = vld [vmem:[%s1 + $0x68] sm:$0xff]
    %v79 = vld [vmem:[%s1 + $0x70] sm:$0xff]
    %v80 = vld [vmem:[%s1 + $0x78] sm:$0xff]
    %v81 = vld [vmem:[#allocation4] ss:$8 sm:$0x3]
    %v83 = vperm.slane %v81, 0
    %v84 = vperm.slane %v81, 1
    %v89 = vunpack.c.l.b16 %v63
    %v90 = vunpack.c.l.b16 %v64
    %v91 = vpack.c.b16 %v90, %v89
    %v109 = vunpack.c.l.b16 %v65
    %v110 = vunpack.c.h.b16 %v65
    %v111 = vunpack.c.l.b16 %v66
    %v112 = vunpack.c.h.b16 %v66
    %v113 = vunpack.c.l.b16 %v67
    %v114 = vunpack.c.h.b16 %v67
    %v115 = vunpack.c.l.b16 %v68
    %v116 = vunpack.c.h.b16 %v68
    %v117 = vunpack.c.l.b16 %v69
    %v118 = vunpack.c.h.b16 %v69
    %v119 = vunpack.c.l.b16 %v70
    %v120 = vunpack.c.h.b16 %v70
    %v121 = vunpack.c.l.b16 %v71
    %v122 = vunpack.c.h.b16 %v71
    %v123 = vunpack.c.l.b16 %v72
    %v124 = vunpack.c.h.b16 %v72
    %v125 = vunpack.c.l.b16 %v73
    %v126 = vunpack.c.h.b16 %v73
    %v127 = vunpack.c.l.b16 %v74
    %v128 = vunpack.c.h.b16 %v74
    %v129 = vunpack.c.l.b16 %v75
    %v130 = vunpack.c.h.b16 %v75
    %v131 = vunpack.c.l.b16 %v76
    %v132 = vunpack.c.h.b16 %v76
    %v133 = vunpack.c.l.b16 %v77
    %v134 = vunpack.c.h.b16 %v77
    %v135 = vunpack.c.l.b16 %v78
    %v136 = vunpack.c.h.b16 %v78
    %v137 = vunpack.c.l.b16 %v79
    %v138 = vunpack.c.h.b16 %v79
    %v139 = vunpack.c.l.b16 %v80
    %v140 = vunpack.c.h.b16 %v80
    %v141 = vpack.c.b16 %v111, %v109
    %v142 = vpack.c.b16 %v112, %v110
    %v143 = vpack.c.b16 %v115, %v113
    %v144 = vpack.c.b16 %v116, %v114
    %v145 = vpack.c.b16 %v119, %v117
    %v146 = vpack.c.b16 %v120, %v118
    %v147 = vpack.c.b16 %v123, %v121
    %v148 = vpack.c.b16 %v124, %v122
    %v149 = vpack.c.b16 %v127, %v125
    %v150 = vpack.c.b16 %v128, %v126
    %v151 = vpack.c.b16 %v131, %v129
    %v152 = vpack.c.b16 %v132, %v130
    %v153 = vpack.c.b16 %v135, %v133
    %v154 = vpack.c.b16 %v136, %v134
    %v155 = vpack.c.b16 %v139, %v137
    %v156 = vpack.c.b16 %v140, %v138
    %173 = vmatpush.bf16.msra.mxu0 %v155
    %174 = vmatpush.bf16.msra.mxu0 %v153
    %175 = vmatpush.bf16.msra.mxu0 %v151
    %176 = vmatpush.bf16.msra.mxu0 %v149
    %177 = vmatpush.bf16.msra.mxu0 %v147
    %178 = vmatpush.bf16.msra.mxu0 %v145
    %179 = vmatpush.bf16.msra.mxu0 %v143
    %180 = vmatpush.bf16.msra.mxu0 %v141
    %181 = vmatmul.bf16.gmra.mxu0 %v91
    %v182 = vpop.f32.mrf.mxu0
    %v183 = vadd.f32 %v83, %v182
    %v184 = vpop.f32.mrf.mxu0
    %v185 = vadd.f32 %v83, %v184
    %186 = vdwg.mxu0
    %187 = vmatpush.bf16.msra.mxu0 %v156
    %188 = vmatpush.bf16.msra.mxu0 %v154
    %189 = vmatpush.bf16.msra.mxu0 %v152
    %190 = vmatpush.bf16.msra.mxu0 %v150
    %191 = vmatpush.bf16.msra.mxu0 %v148
    %192 = vmatpush.bf16.msra.mxu0 %v146
    %193 = vmatpush.bf16.msra.mxu0 %v144
    %194 = vmatpush.bf16.msra.mxu0 %v142
    %195 = vmatmul.bf16.gmra.mxu0 %v91
    %v196 = vpop.f32.mrf.mxu0
    %v197 = vadd.f32 %v84, %v196
    %v198 = vpop.f32.mrf.mxu0
    %v199 = vadd.f32 %v84, %v198
    %200 = vdwg.mxu0
    %v201 = vadd.f32 %v183, %v197
    %202 = vadd.xlane.f32.xlu0 %v201
    %v203 = vpop.xlane.xlu0 %202
    %v204 = vadd.f32 %v185, %v199
    %205 = vadd.xlane.f32.xlu0 %v204
    %v206 = vpop.xlane.xlu0 %205
    %v207 = vrcp.pop 256.0
    %v208 = vmul.f32 256.0, %v207
    %v209 = vsub.f32 1.0, %v208
    %v210 = vmul.f32 %v207, %v209
    %v211 = vadd.f32 %v207, %v210
    %vm212 = vweird.f32 %v207
    %v213 = vsel %vm212, %v207, %v211
    %v214 = vmul.f32 %v203, %v213
    %v215 = vmul.f32 %v206, %v213
    %v216 = vsub.f32 %v183, %v214
    %v217 = vsub.f32 %v197, %v214
    %v218 = vsub.f32 %v185, %v215
    %v219 = vsub.f32 %v199, %v215
    %v220 = vmul.f32 %v216, %v216
    %v221 = vmul.f32 %v217, %v217
    %v222 = vmul.f32 %v218, %v218
    %v223 = vmul.f32 %v219, %v219
    %v224 = vadd.f32 %v220, %v221
    %225 = vadd.xlane.f32.xlu0 %v224
    %v226 = vpop.xlane.xlu0 %225
    %v227 = vadd.f32 %v222, %v223
    %228 = vadd.xlane.f32.xlu0 %v227
    %v229 = vpop.xlane.xlu0 %228
    %v230 = vmul.f32 %v226, %v213
    %v231 = vmul.f32 %v229, %v213
    %v232 = vadd.f32 %v230, 1e-05
    %v233 = vadd.f32 %v231, 1e-05
    %v234 = vrsqrt.pop %v232
    %v235 = vmul.f32 %v234, %v232
    %v236 = vmul.f32 %v235, %v234
    %v237 = vmul.f32 0.5, %v236
    %v238 = vsub.f32 1.5, %v237
    %v239 = vmul.f32 %v234, %v238
    %vm240 = vweird.f32 %v232
    %vm241 = vweird.f32 %v234
    %vm242 = vmor %vm240, %vm241
    %v243 = vsel %vm242, %v234, %v239
    %v244 = vrsqrt.pop %v233
    %v245 = vmul.f32 %v244, %v233
    %v246 = vmul.f32 %v245, %v244
    %v247 = vmul.f32 0.5, %v246
    %v248 = vsub.f32 1.5, %v247
    %v249 = vmul.f32 %v244, %v248
    %vm250 = vweird.f32 %v233
    %vm251 = vweird.f32 %v244
    %vm252 = vmor %vm250, %vm251
    %v253 = vsel %vm252, %v244, %v249
    %v254 = vmul.f32 %v216, %v243
    %v255 = vmul.f32 %v217, %v243
    %v256 = vmul.f32 %v218, %v253
    %v257 = vmul.f32 %v219, %v253
    %v258 = vld [vmem:[%s4] ss:$8 sm:$0x3]
    %s259 = scalar_lea.vmem %s4, 1
    %v260 = vld [vmem:[%s259] ss:$8 sm:$0x3]
    %v261 = vpack.c.bf16 %v255, %v254
    %v262 = vpack.c.bf16 %v257, %v256
    %v264 = vperm.slane %v258, 0
    %v265 = vperm.slane %v258, 1
    %v268 = vpack.c.bf16 %v265, %v264
    %v270 = vunpack.c.l.b16 %v268
    %v271 = vunpack.c.h.b16 %v268
    %v272 = vpack.c.b16 %v270, %v270
    %v273 = vpack.c.b16 %v271, %v271
    %v275 = vpack.i.b16 %v272, %v272
    %v277 = vperm.slane %v275, 0
    %v279 = vpack.i.b16 %v273, %v273
    %v281 = vperm.slane %v279, 0
    %v282 = vunpack.c.l.bf16 %v261
    %v283 = vunpack.c.h.bf16 %v261
    %v284 = vunpack.c.l.bf16 %v262
    %v285 = vunpack.c.h.bf16 %v262
    %v286 = vunpack.c.l.bf16 %v277
    %v287 = vunpack.c.l.bf16 %v281
    %v288 = vmul.f32 %v282, %v286
    %v289 = vmul.f32 %v283, %v287
    %v290 = vmul.f32 %v284, %v286
    %v291 = vmul.f32 %v285, %v287
    %v292 = vpack.c.bf16 %v289, %v288
    %v293 = vpack.c.bf16 %v291, %v290
    %v295 = vperm.slane %v260, 0
    %v296 = vperm.slane %v260, 1
    %v299 = vpack.c.bf16 %v296, %v295
    %v301 = vunpack.c.l.b16 %v299
    %v302 = vunpack.c.h.b16 %v299
    %v303 = vpack.c.b16 %v301, %v301
    %v304 = vpack.c.b16 %v302, %v302
    %v306 = vpack.i.b16 %v303, %v303
    %v308 = vperm.slane %v306, 0
    %v310 = vpack.i.b16 %v304, %v304
    %v312 = vperm.slane %v310, 0
    %v313 = vunpack.c.l.bf16 %v292
    %v314 = vunpack.c.h.bf16 %v292
    %v315 = vunpack.c.l.bf16 %v293
    %v316 = vunpack.c.h.bf16 %v293
    %v317 = vunpack.c.l.bf16 %v308
    %v318 = vunpack.c.l.bf16 %v312
    %v319 = vadd.f32 %v313, %v317
    %v320 = vadd.f32 %v314, %v318
    %v321 = vadd.f32 %v315, %v317
    %v322 = vadd.f32 %v316, %v318
    %v323 = vpack.c.bf16 %v320, %v319
    %v324 = vpack.c.bf16 %v322, %v321
    %v325 = vunpack.c.l.bf16 %v323
    %v326 = vunpack.c.h.bf16 %v323
    %v327 = vunpack.c.l.bf16 %v324
    %v328 = vunpack.c.h.bf16 %v324
    %v329 = vmax.f32 %v325, 0.0
    %v330 = vmax.f32 %v326, 0.0
    %v331 = vmax.f32 %v327, 0.0
    %v332 = vmax.f32 %v328, 0.0
    %v333 = vpack.c.bf16 %v331, %v329
    %v334 = vpack.c.bf16 %v332, %v330
    %v335 = vld [vmem:[#allocation2] sm:$0xff]
    %v336 = vld [vmem:[#allocation2 + $0x8] sm:$0xff]
    %v337 = vld [vmem:[#allocation2 + $0x10] sm:$0xff]
    %v338 = vld [vmem:[#allocation2 + $0x18] sm:$0xff]
    %v339 = vld [vmem:[#allocation2 + $0x20] sm:$0xff]
    %v340 = vld [vmem:[#allocation2 + $0x28] sm:$0xff]
    %v341 = vld [vmem:[#allocation2 + $0x30] sm:$0xff]
    %v342 = vld [vmem:[#allocation2 + $0x38] sm:$0xff]
    %v343 = vld [vmem:[#allocation2 + $0x40] sm:$0xff]
    %v344 = vld [vmem:[#allocation2 + $0x48] sm:$0xff]
    %v345 = vld [vmem:[#allocation2 + $0x50] sm:$0xff]
    %v346 = vld [vmem:[#allocation2 + $0x58] sm:$0xff]
    %v347 = vld [vmem:[#allocation2 + $0x60] sm:$0xff]
    %v348 = vld [vmem:[#allocation2 + $0x68] sm:$0xff]
    %v349 = vld [vmem:[#allocation2 + $0x70] sm:$0xff]
    %v350 = vld [vmem:[#allocation2 + $0x78] sm:$0xff]
    %v351 = vld [vmem:[#allocation2 + $0x80] sm:$0xff]
    %v352 = vld [vmem:[#allocation2 + $0x88] sm:$0xff]
    %v353 = vld [vmem:[#allocation2 + $0x90] sm:$0xff]
    %v354 = vld [vmem:[#allocation2 + $0x98] sm:$0xff]
    %v355 = vld [vmem:[#allocation2 + $0xa0] sm:$0xff]
    %v356 = vld [vmem:[#allocation2 + $0xa8] sm:$0xff]
    %v357 = vld [vmem:[#allocation2 + $0xb0] sm:$0xff]
    %v358 = vld [vmem:[#allocation2 + $0xb8] sm:$0xff]
    %v359 = vld [vmem:[#allocation2 + $0xc0] sm:$0xff]
    %v360 = vld [vmem:[#allocation2 + $0xc8] sm:$0xff]
    %v361 = vld [vmem:[#allocation2 + $0xd0] sm:$0xff]
    %v362 = vld [vmem:[#allocation2 + $0xd8] sm:$0xff]
    %v363 = vld [vmem:[#allocation2 + $0xe0] sm:$0xff]
    %v364 = vld [vmem:[#allocation2 + $0xe8] sm:$0xff]
    %v365 = vld [vmem:[#allocation2 + $0xf0] sm:$0xff]
    %v366 = vld [vmem:[#allocation2 + $0xf8] sm:$0xff]
    %s367 = scalar_lea.vmem [#allocation4], 1
    %v368 = vld [vmem:[%s367] ss:$8 sm:$0x3]
    %v370 = vperm.slane %v368, 0
    %v371 = vperm.slane %v368, 1
    %v406 = vunpack.c.l.b16 %v335
    %v407 = vunpack.c.h.b16 %v335
    %v408 = vunpack.c.l.b16 %v336
    %v409 = vunpack.c.h.b16 %v336
    %v410 = vunpack.c.l.b16 %v337
    %v411 = vunpack.c.h.b16 %v337
    %v412 = vunpack.c.l.b16 %v338
    %v413 = vunpack.c.h.b16 %v338
    %v414 = vunpack.c.l.b16 %v339
    %v415 = vunpack.c.h.b16 %v339
    %v416 = vunpack.c.l.b16 %v340
    %v417 = vunpack.c.h.b16 %v340
    %v418 = vunpack.c.l.b16 %v341
    %v419 = vunpack.c.h.b16 %v341
    %v420 = vunpack.c.l.b16 %v342
    %v421 = vunpack.c.h.b16 %v342
    %v422 = vunpack.c.l.b16 %v343
    %v423 = vunpack.c.h.b16 %v343
    %v424 = vunpack.c.l.b16 %v344
    %v425 = vunpack.c.h.b16 %v344
    %v426 = vunpack.c.l.b16 %v345
    %v427 = vunpack.c.h.b16 %v345
    %v428 = vunpack.c.l.b16 %v346
    %v429 = vunpack.c.h.b16 %v346
    %v430 = vunpack.c.l.b16 %v347
    %v431 = vunpack.c.h.b16 %v347
    %v432 = vunpack.c.l.b16 %v348
    %v433 = vunpack.c.h.b16 %v348
    %v434 = vunpack.c.l.b16 %v349
    %v435 = vunpack.c.h.b16 %v349
    %v436 = vunpack.c.l.b16 %v350
    %v437 = vunpack.c.h.b16 %v350
    %v438 = vunpack.c.l.b16 %v351
    %v439 = vunpack.c.h.b16 %v351
    %v440 = vunpack.c.l.b16 %v352
    %v441 = vunpack.c.h.b16 %v352
    %v442 = vunpack.c.l.b16 %v353
    %v443 = vunpack.c.h.b16 %v353
    %v444 = vunpack.c.l.b16 %v354
    %v445 = vunpack.c.h.b16 %v354
    %v446 = vunpack.c.l.b16 %v355
    %v447 = vunpack.c.h.b16 %v355
    %v448 = vunpack.c.l.b16 %v356
    %v449 = vunpack.c.h.b16 %v356
    %v450 = vunpack.c.l.b16 %v357
    %v451 = vunpack.c.h.b16 %v357
    %v452 = vunpack.c.l.b16 %v358
    %v453 = vunpack.c.h.b16 %v358
    %v454 = vunpack.c.l.b16 %v359
    %v455 = vunpack.c.h.b16 %v359
    %v456 = vunpack.c.l.b16 %v360
    %v457 = vunpack.c.h.b16 %v360
    %v458 = vunpack.c.l.b16 %v361
    %v459 = vunpack.c.h.b16 %v361
    %v460 = vunpack.c.l.b16 %v362
    %v461 = vunpack.c.h.b16 %v362
    %v462 = vunpack.c.l.b16 %v363
    %v463 = vunpack.c.h.b16 %v363
    %v464 = vunpack.c.l.b16 %v364
    %v465 = vunpack.c.h.b16 %v364
    %v466 = vunpack.c.l.b16 %v365
    %v467 = vunpack.c.h.b16 %v365
    %v468 = vunpack.c.l.b16 %v366
    %v469 = vunpack.c.h.b16 %v366
    %v470 = vpack.c.b16 %v408, %v406
    %v471 = vpack.c.b16 %v409, %v407
    %v472 = vpack.c.b16 %v412, %v410
    %v473 = vpack.c.b16 %v413, %v411
    %v474 = vpack.c.b16 %v416, %v414
    %v475 = vpack.c.b16 %v417, %v415
    %v476 = vpack.c.b16 %v420, %v418
    %v477 = vpack.c.b16 %v421, %v419
    %v478 = vpack.c.b16 %v424, %v422
    %v479 = vpack.c.b16 %v425, %v423
    %v480 = vpack.c.b16 %v428, %v426
    %v481 = vpack.c.b16 %v429, %v427
    %v482 = vpack.c.b16 %v432, %v430
    %v483 = vpack.c.b16 %v433, %v431
    %v484 = vpack.c.b16 %v436, %v434
    %v485 = vpack.c.b16 %v437, %v435
    %v486 = vpack.c.b16 %v440, %v438
    %v487 = vpack.c.b16 %v441, %v439
    %v488 = vpack.c.b16 %v444, %v442
    %v489 = vpack.c.b16 %v445, %v443
    %v490 = vpack.c.b16 %v448, %v446
    %v491 = vpack.c.b16 %v449, %v447
    %v492 = vpack.c.b16 %v452, %v450
    %v493 = vpack.c.b16 %v453, %v451
    %v494 = vpack.c.b16 %v456, %v454
    %v495 = vpack.c.b16 %v457, %v455
    %v496 = vpack.c.b16 %v460, %v458
    %v497 = vpack.c.b16 %v461, %v459
    %v498 = vpack.c.b16 %v464, %v462
    %v499 = vpack.c.b16 %v465, %v463
    %v500 = vpack.c.b16 %v468, %v466
    %v501 = vpack.c.b16 %v469, %v467
    %534 = vmatpush.bf16.msra.mxu0 %v484
    %535 = vmatpush.bf16.msra.mxu0 %v482
    %536 = vmatpush.bf16.msra.mxu0 %v480
    %537 = vmatpush.bf16.msra.mxu0 %v478
    %538 = vmatpush.bf16.msra.mxu0 %v476
    %539 = vmatpush.bf16.msra.mxu0 %v474
    %540 = vmatpush.bf16.msra.mxu0 %v472
    %541 = vmatpush.bf16.msra.mxu0 %v470
    %542 = vmatmul.bf16.gmra.mxu0 %v333
    %v543 = vpop.f32.mrf.mxu0
    %v544 = vadd.f32 %v370, %v543
    %v545 = vpop.f32.mrf.mxu0
    %v546 = vadd.f32 %v370, %v545
    %547 = vdwg.mxu0
    %548 = vmatpush.bf16.msra.mxu0 %v500
    %549 = vmatpush.bf16.msra.mxu0 %v498
    %550 = vmatpush.bf16.msra.mxu0 %v496
    %551 = vmatpush.bf16.msra.mxu0 %v494
    %552 = vmatpush.bf16.msra.mxu0 %v492
    %553 = vmatpush.bf16.msra.mxu0 %v490
    %554 = vmatpush.bf16.msra.mxu0 %v488
    %555 = vmatpush.bf16.msra.mxu0 %v486
    %556 = vmatmul.bf16.gmra.mxu0 %v334
    %v557 = vpop.f32.mrf.mxu0
    %v558 = vadd.f32 %v544, %v557
    %v559 = vpop.f32.mrf.mxu0
    %v560 = vadd.f32 %v546, %v559
    %561 = vdwg.mxu0
    %562 = vmatpush.bf16.msra.mxu0 %v485
    %563 = vmatpush.bf16.msra.mxu0 %v483
    %564 = vmatpush.bf16.msra.mxu0 %v481
    %565 = vmatpush.bf16.msra.mxu0 %v479
    %566 = vmatpush.bf16.msra.mxu0 %v477
    %567 = vmatpush.bf16.msra.mxu0 %v475
    %568 = vmatpush.bf16.msra.mxu0 %v473
    %569 = vmatpush.bf16.msra.mxu0 %v471
    %570 = vmatmul.bf16.gmra.mxu0 %v333
    %v571 = vpop.f32.mrf.mxu0
    %v572 = vadd.f32 %v371, %v571
    %v573 = vpop.f32.mrf.mxu0
    %v574 = vadd.f32 %v371, %v573
    %575 = vdwg.mxu0
    %576 = vmatpush.bf16.msra.mxu0 %v501
    %577 = vmatpush.bf16.msra.mxu0 %v499
    %578 = vmatpush.bf16.msra.mxu0 %v497
    %579 = vmatpush.bf16.msra.mxu0 %v495
    %580 = vmatpush.bf16.msra.mxu0 %v493
    %581 = vmatpush.bf16.msra.mxu0 %v491
    %582 = vmatpush.bf16.msra.mxu0 %v489
    %583 = vmatpush.bf16.msra.mxu0 %v487
    %584 = vmatmul.bf16.gmra.mxu0 %v334
    %v585 = vpop.f32.mrf.mxu0
    %v586 = vadd.f32 %v572, %v585
    %v587 = vpop.f32.mrf.mxu0
    %v588 = vadd.f32 %v574, %v587
    %589 = vdwg.mxu0
    %v590 = vadd.f32 %v558, %v586
    %591 = vadd.xlane.f32.xlu0 %v590
    %v592 = vpop.xlane.xlu0 %591
    %v593 = vadd.f32 %v560, %v588
    %594 = vadd.xlane.f32.xlu0 %v593
    %v595 = vpop.xlane.xlu0 %594
    %v596 = vmul.f32 %v592, %v213
    %v597 = vmul.f32 %v595, %v213
    %v598 = vsub.f32 %v558, %v596
    %v599 = vsub.f32 %v586, %v596
    %v600 = vsub.f32 %v560, %v597
    %v601 = vsub.f32 %v588, %v597
    %v602 = vmul.f32 %v598, %v598
    %v603 = vmul.f32 %v599, %v599
    %v604 = vmul.f32 %v600, %v600
    %v605 = vmul.f32 %v601, %v601
    %v606 = vadd.f32 %v602, %v603
    %607 = vadd.xlane.f32.xlu0 %v606
    %v608 = vpop.xlane.xlu0 %607
    %v609 = vadd.f32 %v604, %v605
    %610 = vadd.xlane.f32.xlu0 %v609
    %v611 = vpop.xlane.xlu0 %610
    %v612 = vmul.f32 %v608, %v213
    %v613 = vmul.f32 %v611, %v213
    %v614 = vadd.f32 %v612, 1e-05
    %v615 = vadd.f32 %v613, 1e-05
    %v616 = vrsqrt.pop %v614
    %v617 = vmul.f32 %v616, %v614
    %v618 = vmul.f32 %v617, %v616
    %v619 = vmul.f32 0.5, %v618
    %v620 = vsub.f32 1.5, %v619
    %v621 = vmul.f32 %v616, %v620
    %vm622 = vweird.f32 %v614
    %vm623 = vweird.f32 %v616
    %vm624 = vmor %vm622, %vm623
    %v625 = vsel %vm624, %v616, %v621
    %v626 = vrsqrt.pop %v615
    %v627 = vmul.f32 %v626, %v615
    %v628 = vmul.f32 %v627, %v626
    %v629 = vmul.f32 0.5, %v628
    %v630 = vsub.f32 1.5, %v629
    %v631 = vmul.f32 %v626, %v630
    %vm632 = vweird.f32 %v615
    %vm633 = vweird.f32 %v626
    %vm634 = vmor %vm632, %vm633
    %v635 = vsel %vm634, %v626, %v631
    %v636 = vmul.f32 %v598, %v625
    %v637 = vmul.f32 %v599, %v625
    %v638 = vmul.f32 %v600, %v635
    %v639 = vmul.f32 %v601, %v635
    %s640 = scalar_lea.vmem %s4, 2
    %v641 = vld [vmem:[%s640] ss:$8 sm:$0x3]
    %s642 = scalar_lea.vmem %s4, 3
    %v643 = vld [vmem:[%s642] ss:$8 sm:$0x3]
    %v644 = vpack.c.bf16 %v637, %v636
    %v645 = vpack.c.bf16 %v639, %v638
    %v647 = vperm.slane %v641, 0
    %v648 = vperm.slane %v641, 1
    %v651 = vpack.c.bf16 %v648, %v647
    %v653 = vunpack.c.l.b16 %v651
    %v654 = vunpack.c.h.b16 %v651
    %v655 = vpack.c.b16 %v653, %v653
    %v656 = vpack.c.b16 %v654, %v654
    %v658 = vpack.i.b16 %v655, %v655
    %v660 = vperm.slane %v658, 0
    %v662 = vpack.i.b16 %v656, %v656
    %v664 = vperm.slane %v662, 0
    %v665 = vunpack.c.l.bf16 %v644
    %v666 = vunpack.c.h.bf16 %v644
    %v667 = vunpack.c.l.bf16 %v645
    %v668 = vunpack.c.h.bf16 %v645
    %v669 = vunpack.c.l.bf16 %v660
    %v670 = vunpack.c.l.bf16 %v664
    %v671 = vmul.f32 %v665, %v669
    %v672 = vmul.f32 %v666, %v670
    %v673 = vmul.f32 %v667, %v669
    %v674 = vmul.f32 %v668, %v670
    %v675 = vpack.c.bf16 %v672, %v671
    %v676 = vpack.c.bf16 %v674, %v673
    %v678 = vperm.slane %v643, 0
    %v679 = vperm.slane %v643, 1
    %v682 = vpack.c.bf16 %v679, %v678
    %v684 = vunpack.c.l.b16 %v682
    %v685 = vunpack.c.h.b16 %v682
    %v686 = vpack.c.b16 %v684, %v684
    %v687 = vpack.c.b16 %v685, %v685
    %v689 = vpack.i.b16 %v686, %v686
    %v691 = vperm.slane %v689, 0
    %v693 = vpack.i.b16 %v687, %v687
    %v695 = vperm.slane %v693, 0
    %v696 = vunpack.c.l.bf16 %v675
    %v697 = vunpack.c.h.bf16 %v675
    %v698 = vunpack.c.l.bf16 %v676
    %v699 = vunpack.c.h.bf16 %v676
    %v700 = vunpack.c.l.bf16 %v691
    %v701 = vunpack.c.l.bf16 %v695
    %v702 = vadd.f32 %v696, %v700
    %v703 = vadd.f32 %v697, %v701
    %v704 = vadd.f32 %v698, %v700
    %v705 = vadd.f32 %v699, %v701
    %v706 = vpack.c.bf16 %v703, %v702
    %v707 = vpack.c.bf16 %v705, %v704
    %v708 = vunpack.c.l.bf16 %v706
    %v709 = vunpack.c.h.bf16 %v706
    %v710 = vunpack.c.l.bf16 %v707
    %v711 = vunpack.c.h.bf16 %v707
    %v712 = vmax.f32 %v708, 0.0
    %v713 = vmax.f32 %v709, 0.0
    %v714 = vmax.f32 %v710, 0.0
    %v715 = vmax.f32 %v711, 0.0
    %v716 = vpack.c.bf16 %v714, %v712
    %v717 = vpack.c.bf16 %v715, %v713
    %s718 = scalar_lea.vmem [#allocation2], 256
    %v719 = vld [vmem:[%s718] sm:$0xff]
    %v720 = vld [vmem:[%s718 + $0x8] sm:$0xff]
    %v721 = vld [vmem:[%s718 + $0x10] sm:$0xff]
    %v722 = vld [vmem:[%s718 + $0x18] sm:$0xff]
    %v723 = vld [vmem:[%s718 + $0x20] sm:$0xff]
    %v724 = vld [vmem:[%s718 + $0x28] sm:$0xff]
    %v725 = vld [vmem:[%s718 + $0x30] sm:$0xff]
    %v726 = vld [vmem:[%s718 + $0x38] sm:$0xff]
    %v727 = vld [vmem:[%s718 + $0x40] sm:$0xff]
    %v728 = vld [vmem:[%s718 + $0x48] sm:$0xff]
    %v729 = vld [vmem:[%s718 + $0x50] sm:$0xff]
    %v730 = vld [vmem:[%s718 + $0x58] sm:$0xff]
    %v731 = vld [vmem:[%s718 + $0x60] sm:$0xff]
    %v732 = vld [vmem:[%s718 + $0x68] sm:$0xff]
    %v733 = vld [vmem:[%s718 + $0x70] sm:$0xff]
    %v734 = vld [vmem:[%s718 + $0x78] sm:$0xff]
    %v735 = vld [vmem:[%s718 + $0x80] sm:$0xff]
    %v736 = vld [vmem:[%s718 + $0x88] sm:$0xff]
    %v737 = vld [vmem:[%s718 + $0x90] sm:$0xff]
    %v738 = vld [vmem:[%s718 + $0x98] sm:$0xff]
    %v739 = vld [vmem:[%s718 + $0xa0] sm:$0xff]
    %v740 = vld [vmem:[%s718 + $0xa8] sm:$0xff]
    %v741 = vld [vmem:[%s718 + $0xb0] sm:$0xff]
    %v742 = vld [vmem:[%s718 + $0xb8] sm:$0xff]
    %v743 = vld [vmem:[%s718 + $0xc0] sm:$0xff]
    %v744 = vld [vmem:[%s718 + $0xc8] sm:$0xff]
    %v745 = vld [vmem:[%s718 + $0xd0] sm:$0xff]
    %v746 = vld [vmem:[%s718 + $0xd8] sm:$0xff]
    %v747 = vld [vmem:[%s718 + $0xe0] sm:$0xff]
    %v748 = vld [vmem:[%s718 + $0xe8] sm:$0xff]
    %v749 = vld [vmem:[%s718 + $0xf0] sm:$0xff]
    %v750 = vld [vmem:[%s718 + $0xf8] sm:$0xff]
    %s751 = scalar_lea.vmem [#allocation4], 2
    %v752 = vld [vmem:[%s751] ss:$8 sm:$0x3]
    %v754 = vperm.slane %v752, 0
    %v755 = vperm.slane %v752, 1
    %v790 = vunpack.c.l.b16 %v719
    %v791 = vunpack.c.h.b16 %v719
    %v792 = vunpack.c.l.b16 %v720
    %v793 = vunpack.c.h.b16 %v720
    %v794 = vunpack.c.l.b16 %v721
    %v795 = vunpack.c.h.b16 %v721
    %v796 = vunpack.c.l.b16 %v722
    %v797 = vunpack.c.h.b16 %v722
    %v798 = vunpack.c.l.b16 %v723
    %v799 = vunpack.c.h.b16 %v723
    %v800 = vunpack.c.l.b16 %v724
    %v801 = vunpack.c.h.b16 %v724
    %v802 = vunpack.c.l.b16 %v725
    %v803 = vunpack.c.h.b16 %v725
    %v804 = vunpack.c.l.b16 %v726
    %v805 = vunpack.c.h.b16 %v726
    %v806 = vunpack.c.l.b16 %v727
    %v807 = vunpack.c.h.b16 %v727
    %v808 = vunpack.c.l.b16 %v728
    %v809 = vunpack.c.h.b16 %v728
    %v810 = vunpack.c.l.b16 %v729
    %v811 = vunpack.c.h.b16 %v729
    %v812 = vunpack.c.l.b16 %v730
    %v813 = vunpack.c.h.b16 %v730
    %v814 = vunpack.c.l.b16 %v731
    %v815 = vunpack.c.h.b16 %v731
    %v816 = vunpack.c.l.b16 %v732
    %v817 = vunpack.c.h.b16 %v732
    %v818 = vunpack.c.l.b16 %v733
    %v819 = vunpack.c.h.b16 %v733
    %v820 = vunpack.c.l.b16 %v734
    %v821 = vunpack.c.h.b16 %v734
    %v822 = vunpack.c.l.b16 %v735
    %v823 = vunpack.c.h.b16 %v735
    %v824 = vunpack.c.l.b16 %v736
    %v825 = vunpack.c.h.b16 %v736
    %v826 = vunpack.c.l.b16 %v737
    %v827 = vunpack.c.h.b16 %v737
    %v828 = vunpack.c.l.b16 %v738
    %v829 = vunpack.c.h.b16 %v738
    %v830 = vunpack.c.l.b16 %v739
    %v831 = vunpack.c.h.b16 %v739
    %v832 = vunpack.c.l.b16 %v740
    %v833 = vunpack.c.h.b16 %v740
    %v834 = vunpack.c.l.b16 %v741
    %v835 = vunpack.c.h.b16 %v741
    %v836 = vunpack.c.l.b16 %v742
    %v837 = vunpack.c.h.b16 %v742
    %v838 = vunpack.c.l.b16 %v743
    %v839 = vunpack.c.h.b16 %v743
    %v840 = vunpack.c.l.b16 %v744
    %v841 = vunpack.c.h.b16 %v744
    %v842 = vunpack.c.l.b16 %v745
    %v843 = vunpack.c.h.b16 %v745
    %v844 = vunpack.c.l.b16 %v746
    %v845 = vunpack.c.h.b16 %v746
    %v846 = vunpack.c.l.b16 %v747
    %v847 = vunpack.c.h.b16 %v747
    %v848 = vunpack.c.l.b16 %v748
    %v849 = vunpack.c.h.b16 %v748
    %v850 = vunpack.c.l.b16 %v749
    %v851 = vunpack.c.h.b16 %v749
    %v852 = vunpack.c.l.b16 %v750
    %v853 = vunpack.c.h.b16 %v750
    %v854 = vpack.c.b16 %v792, %v790
    %v855 = vpack.c.b16 %v793, %v791
    %v856 = vpack.c.b16 %v796, %v794
    %v857 = vpack.c.b16 %v797, %v795
    %v858 = vpack.c.b16 %v800, %v798
    %v859 = vpack.c.b16 %v801, %v799
    %v860 = vpack.c.b16 %v804, %v802
    %v861 = vpack.c.b16 %v805, %v803
    %v862 = vpack.c.b16 %v808, %v806
    %v863 = vpack.c.b16 %v809, %v807
    %v864 = vpack.c.b16 %v812, %v810
    %v865 = vpack.c.b16 %v813, %v811
    %v866 = vpack.c.b16 %v816, %v814
    %v867 = vpack.c.b16 %v817, %v815
    %v868 = vpack.c.b16 %v820, %v818
    %v869 = vpack.c.b16 %v821, %v819
    %v870 = vpack.c.b16 %v824, %v822
    %v871 = vpack.c.b16 %v825, %v823
    %v872 = vpack.c.b16 %v828, %v826
    %v873 = vpack.c.b16 %v829, %v827
    %v874 = vpack.c.b16 %v832, %v830
    %v875 = vpack.c.b16 %v833, %v831
    %v876 = vpack.c.b16 %v836, %v834
    %v877 = vpack.c.b16 %v837, %v835
    %v878 = vpack.c.b16 %v840, %v838
    %v879 = vpack.c.b16 %v841, %v839
    %v880 = vpack.c.b16 %v844, %v842
    %v881 = vpack.c.b16 %v845, %v843
    %v882 = vpack.c.b16 %v848, %v846
    %v883 = vpack.c.b16 %v849, %v847
    %v884 = vpack.c.b16 %v852, %v850
    %v885 = vpack.c.b16 %v853, %v851
    %918 = vmatpush.bf16.msra.mxu0 %v868
    %919 = vmatpush.bf16.msra.mxu0 %v866
    %920 = vmatpush.bf16.msra.mxu0 %v864
    %921 = vmatpush.bf16.msra.mxu0 %v862
    %922 = vmatpush.bf16.msra.mxu0 %v860
    %923 = vmatpush.bf16.msra.mxu0 %v858
    %924 = vmatpush.bf16.msra.mxu0 %v856
    %925 = vmatpush.bf16.msra.mxu0 %v854
    %926 = vmatmul.bf16.gmra.mxu0 %v716
    %v927 = vpop.f32.mrf.mxu0
    %v928 = vadd.f32 %v754, %v927
    %v929 = vpop.f32.mrf.mxu0
    %v930 = vadd.f32 %v754, %v929
    %931 = vdwg.mxu0
    %932 = vmatpush.bf16.msra.mxu0 %v884
    %933 = vmatpush.bf16.msra.mxu0 %v882
    %934 = vmatpush.bf16.msra.mxu0 %v880
    %935 = vmatpush.bf16.msra.mxu0 %v878
    %936 = vmatpush.bf16.msra.mxu0 %v876
    %937 = vmatpush.bf16.msra.mxu0 %v874
    %938 = vmatpush.bf16.msra.mxu0 %v872
    %939 = vmatpush.bf16.msra.mxu0 %v870
    %940 = vmatmul.bf16.gmra.mxu0 %v717
    %v941 = vpop.f32.mrf.mxu0
    %v942 = vadd.f32 %v928, %v941
    %v943 = vpop.f32.mrf.mxu0
    %v944 = vadd.f32 %v930, %v943
    %945 = vdwg.mxu0
    %946 = vmatpush.bf16.msra.mxu0 %v869
    %947 = vmatpush.bf16.msra.mxu0 %v867
    %948 = vmatpush.bf16.msra.mxu0 %v865
    %949 = vmatpush.bf16.msra.mxu0 %v863
    %950 = vmatpush.bf16.msra.mxu0 %v861
    %951 = vmatpush.bf16.msra.mxu0 %v859
    %952 = vmatpush.bf16.msra.mxu0 %v857
    %953 = vmatpush.bf16.msra.mxu0 %v855
    %954 = vmatmul.bf16.gmra.mxu0 %v716
    %v955 = vpop.f32.mrf.mxu0
    %v956 = vadd.f32 %v755, %v955
    %v957 = vpop.f32.mrf.mxu0
    %v958 = vadd.f32 %v755, %v957
    %959 = vdwg.mxu0
    %960 = vmatpush.bf16.msra.mxu0 %v885
    %961 = vmatpush.bf16.msra.mxu0 %v883
    %962 = vmatpush.bf16.msra.mxu0 %v881
    %963 = vmatpush.bf16.msra.mxu0 %v879
    %964 = vmatpush.bf16.msra.mxu0 %v877
    %965 = vmatpush.bf16.msra.mxu0 %v875
    %966 = vmatpush.bf16.msra.mxu0 %v873
    %967 = vmatpush.bf16.msra.mxu0 %v871
    %968 = vmatmul.bf16.gmra.mxu0 %v717
    %v969 = vpop.f32.mrf.mxu0
    %v970 = vadd.f32 %v956, %v969
    %v971 = vpop.f32.mrf.mxu0
    %v972 = vadd.f32 %v958, %v971
    %973 = vdwg.mxu0
    %v974 = vadd.f32 %v942, %v970
    %975 = vadd.xlane.f32.xlu0 %v974
    %v976 = vpop.xlane.xlu0 %975
    %v977 = vadd.f32 %v944, %v972
    %978 = vadd.xlane.f32.xlu0 %v977
    %v979 = vpop.xlane.xlu0 %978
    %v980 = vmul.f32 %v976, %v213
    %v981 = vmul.f32 %v979, %v213
    %v982 = vsub.f32 %v942, %v980
    %v983 = vsub.f32 %v970, %v980
    %v984 = vsub.f32 %v944, %v981
    %v985 = vsub.f32 %v972, %v981
    %v986 = vmul.f32 %v982, %v982
    %v987 = vmul.f32 %v983, %v983
    %v988 = vmul.f32 %v984, %v984
    %v989 = vmul.f32 %v985, %v985
    %v990 = vadd.f32 %v986, %v987
    %991 = vadd.xlane.f32.xlu0 %v990
    %v992 = vpop.xlane.xlu0 %991
    %v993 = vadd.f32 %v988, %v989
    %994 = vadd.xlane.f32.xlu0 %v993
    %v995 = vpop.xlane.xlu0 %994
    %v996 = vmul.f32 %v992, %v213
    %v997 = vmul.f32 %v995, %v213
    %v998 = vadd.f32 %v996, 1e-05
    %v999 = vadd.f32 %v997, 1e-05
    %v1000 = vrsqrt.pop %v998
    %v1001 = vmul.f32 %v1000, %v998
    %v1002 = vmul.f32 %v1001, %v1000
    %v1003 = vmul.f32 0.5, %v1002
    %v1004 = vsub.f32 1.5, %v1003
    %v1005 = vmul.f32 %v1000, %v1004
    %vm1006 = vweird.f32 %v998
    %vm1007 = vweird.f32 %v1000
    %vm1008 = vmor %vm1006, %vm1007
    %v1009 = vsel %vm1008, %v1000, %v1005
    %v1010 = vrsqrt.pop %v999
    %v1011 = vmul.f32 %v1010, %v999
    %v1012 = vmul.f32 %v1011, %v1010
    %v1013 = vmul.f32 0.5, %v1012
    %v1014 = vsub.f32 1.5, %v1013
    %v1015 = vmul.f32 %v1010, %v1014
    %vm1016 = vweird.f32 %v999
    %vm1017 = vweird.f32 %v1010
    %vm1018 = vmor %vm1016, %vm1017
    %v1019 = vsel %vm1018, %v1010, %v1015
    %v1020 = vmul.f32 %v982, %v1009
    %v1021 = vmul.f32 %v983, %v1009
    %v1022 = vmul.f32 %v984, %v1019
    %v1023 = vmul.f32 %v985, %v1019
    %s1024 = scalar_lea.vmem %s4, 4
    %v1025 = vld [vmem:[%s1024] ss:$8 sm:$0x3]
    %s1026 = scalar_lea.vmem %s4, 5
    %v1027 = vld [vmem:[%s1026] ss:$8 sm:$0x3]
    %v1028 = vpack.c.bf16 %v1021, %v1020
    %v1029 = vpack.c.bf16 %v1023, %v1022
    %v1031 = vperm.slane %v1025, 0
    %v1032 = vperm.slane %v1025, 1
    %v1035 = vpack.c.bf16 %v1032, %v1031
    %v1037 = vunpack.c.l.b16 %v1035
    %v1038 = vunpack.c.h.b16 %v1035
    %v1039 = vpack.c.b16 %v1037, %v1037
    %v1040 = vpack.c.b16 %v1038, %v1038
    %v1042 = vpack.i.b16 %v1039, %v1039
    %v1044 = vperm.slane %v1042, 0
    %v1046 = vpack.i.b16 %v1040, %v1040
    %v1048 = vperm.slane %v1046, 0
    %v1049 = vunpack.c.l.bf16 %v1028
    %v1050 = vunpack.c.h.bf16 %v1028
    %v1051 = vunpack.c.l.bf16 %v1029
    %v1052 = vunpack.c.h.bf16 %v1029
    %v1053 = vunpack.c.l.bf16 %v1044
    %v1054 = vunpack.c.l.bf16 %v1048
    %v1055 = vmul.f32 %v1049, %v1053
    %v1056 = vmul.f32 %v1050, %v1054
    %v1057 = vmul.f32 %v1051, %v1053
    %v1058 = vmul.f32 %v1052, %v1054
    %v1059 = vpack.c.bf16 %v1056, %v1055
    %v1060 = vpack.c.bf16 %v1058, %v1057
    %v1062 = vperm.slane %v1027, 0
    %v1063 = vperm.slane %v1027, 1
    %v1066 = vpack.c.bf16 %v1063, %v1062
    %v1068 = vunpack.c.l.b16 %v1066
    %v1069 = vunpack.c.h.b16 %v1066
    %v1070 = vpack.c.b16 %v1068, %v1068
    %v1071 = vpack.c.b16 %v1069, %v1069
    %v1073 = vpack.i.b16 %v1070, %v1070
    %v1075 = vperm.slane %v1073, 0
    %v1077 = vpack.i.b16 %v1071, %v1071
    %v1079 = vperm.slane %v1077, 0
    %v1080 = vunpack.c.l.bf16 %v1059
    %v1081 = vunpack.c.h.bf16 %v1059
    %v1082 = vunpack.c.l.bf16 %v1060
    %v1083 = vunpack.c.h.bf16 %v1060
    %v1084 = vunpack.c.l.bf16 %v1075
    %v1085 = vunpack.c.l.bf16 %v1079
    %v1086 = vadd.f32 %v1080, %v1084
    %v1087 = vadd.f32 %v1081, %v1085
    %v1088 = vadd.f32 %v1082, %v1084
    %v1089 = vadd.f32 %v1083, %v1085
    %v1090 = vpack.c.bf16 %v1087, %v1086
    %v1091 = vpack.c.bf16 %v1089, %v1088
    %v1092 = vunpack.c.l.bf16 %v1090
    %v1093 = vunpack.c.h.bf16 %v1090
    %v1094 = vunpack.c.l.bf16 %v1091
    %v1095 = vunpack.c.h.bf16 %v1091
    %v1096 = vmax.f32 %v1092, 0.0
    %v1097 = vmax.f32 %v1093, 0.0
    %v1098 = vmax.f32 %v1094, 0.0
    %v1099 = vmax.f32 %v1095, 0.0
    %v1100 = vpack.c.bf16 %v1098, %v1096
    %v1101 = vpack.c.bf16 %v1099, %v1097
    %s1102 = scalar_lea.vmem [#allocation2], 512
    %v1103 = vld [vmem:[%s1102] sm:$0xff]
    %v1104 = vld [vmem:[%s1102 + $0x8] sm:$0xff]
    %v1105 = vld [vmem:[%s1102 + $0x10] sm:$0xff]
    %v1106 = vld [vmem:[%s1102 + $0x18] sm:$0xff]
    %v1107 = vld [vmem:[%s1102 + $0x20] sm:$0xff]
    %v1108 = vld [vmem:[%s1102 + $0x28] sm:$0xff]
    %v1109 = vld [vmem:[%s1102 + $0x30] sm:$0xff]
    %v1110 = vld [vmem:[%s1102 + $0x38] sm:$0xff]
    %v1111 = vld [vmem:[%s1102 + $0x40] sm:$0xff]
    %v1112 = vld [vmem:[%s1102 + $0x48] sm:$0xff]
    %v1113 = vld [vmem:[%s1102 + $0x50] sm:$0xff]
    %v1114 = vld [vmem:[%s1102 + $0x58] sm:$0xff]
    %v1115 = vld [vmem:[%s1102 + $0x60] sm:$0xff]
    %v1116 = vld [vmem:[%s1102 + $0x68] sm:$0xff]
    %v1117 = vld [vmem:[%s1102 + $0x70] sm:$0xff]
    %v1118 = vld [vmem:[%s1102 + $0x78] sm:$0xff]
    %v1119 = vld [vmem:[%s1102 + $0x80] sm:$0xff]
    %v1120 = vld [vmem:[%s1102 + $0x88] sm:$0xff]
    %v1121 = vld [vmem:[%s1102 + $0x90] sm:$0xff]
    %v1122 = vld [vmem:[%s1102 + $0x98] sm:$0xff]
    %v1123 = vld [vmem:[%s1102 + $0xa0] sm:$0xff]
    %v1124 = vld [vmem:[%s1102 + $0xa8] sm:$0xff]
    %v1125 = vld [vmem:[%s1102 + $0xb0] sm:$0xff]
    %v1126 = vld [vmem:[%s1102 + $0xb8] sm:$0xff]
    %v1127 = vld [vmem:[%s1102 + $0xc0] sm:$0xff]
    %v1128 = vld [vmem:[%s1102 + $0xc8] sm:$0xff]
    %v1129 = vld [vmem:[%s1102 + $0xd0] sm:$0xff]
    %v1130 = vld [vmem:[%s1102 + $0xd8] sm:$0xff]
    %v1131 = vld [vmem:[%s1102 + $0xe0] sm:$0xff]
    %v1132 = vld [vmem:[%s1102 + $0xe8] sm:$0xff]
    %v1133 = vld [vmem:[%s1102 + $0xf0] sm:$0xff]
    %v1134 = vld [vmem:[%s1102 + $0xf8] sm:$0xff]
    %s1135 = scalar_lea.vmem [#allocation4], 3
    %v1136 = vld [vmem:[%s1135] ss:$8 sm:$0x3]
    %v1138 = vperm.slane %v1136, 0
    %v1139 = vperm.slane %v1136, 1
    %v1174 = vunpack.c.l.b16 %v1103
    %v1175 = vunpack.c.h.b16 %v1103
    %v1176 = vunpack.c.l.b16 %v1104
    %v1177 = vunpack.c.h.b16 %v1104
    %v1178 = vunpack.c.l.b16 %v1105
    %v1179 = vunpack.c.h.b16 %v1105
    %v1180 = vunpack.c.l.b16 %v1106
    %v1181 = vunpack.c.h.b16 %v1106
    %v1182 = vunpack.c.l.b16 %v1107
    %v1183 = vunpack.c.h.b16 %v1107
    %v1184 = vunpack.c.l.b16 %v1108
    %v1185 = vunpack.c.h.b16 %v1108
    %v1186 = vunpack.c.l.b16 %v1109
    %v1187 = vunpack.c.h.b16 %v1109
    %v1188 = vunpack.c.l.b16 %v1110
    %v1189 = vunpack.c.h.b16 %v1110
    %v1190 = vunpack.c.l.b16 %v1111
    %v1191 = vunpack.c.h.b16 %v1111
    %v1192 = vunpack.c.l.b16 %v1112
    %v1193 = vunpack.c.h.b16 %v1112
    %v1194 = vunpack.c.l.b16 %v1113
    %v1195 = vunpack.c.h.b16 %v1113
    %v1196 = vunpack.c.l.b16 %v1114
    %v1197 = vunpack.c.h.b16 %v1114
    %v1198 = vunpack.c.l.b16 %v1115
    %v1199 = vunpack.c.h.b16 %v1115
    %v1200 = vunpack.c.l.b16 %v1116
    %v1201 = vunpack.c.h.b16 %v1116
    %v1202 = vunpack.c.l.b16 %v1117
    %v1203 = vunpack.c.h.b16 %v1117
    %v1204 = vunpack.c.l.b16 %v1118
    %v1205 = vunpack.c.h.b16 %v1118
    %v1206 = vunpack.c.l.b16 %v1119
    %v1207 = vunpack.c.h.b16 %v1119
    %v1208 = vunpack.c.l.b16 %v1120
    %v1209 = vunpack.c.h.b16 %v1120
    %v1210 = vunpack.c.l.b16 %v1121
    %v1211 = vunpack.c.h.b16 %v1121
    %v1212 = vunpack.c.l.b16 %v1122
    %v1213 = vunpack.c.h.b16 %v1122
    %v1214 = vunpack.c.l.b16 %v1123
    %v1215 = vunpack.c.h.b16 %v1123
    %v1216 = vunpack.c.l.b16 %v1124
    %v1217 = vunpack.c.h.b16 %v1124
    %v1218 = vunpack.c.l.b16 %v1125
    %v1219 = vunpack.c.h.b16 %v1125
    %v1220 = vunpack.c.l.b16 %v1126
    %v1221 = vunpack.c.h.b16 %v1126
    %v1222 = vunpack.c.l.b16 %v1127
    %v1223 = vunpack.c.h.b16 %v1127
    %v1224 = vunpack.c.l.b16 %v1128
    %v1225 = vunpack.c.h.b16 %v1128
    %v1226 = vunpack.c.l.b16 %v1129
    %v1227 = vunpack.c.h.b16 %v1129
    %v1228 = vunpack.c.l.b16 %v1130
    %v1229 = vunpack.c.h.b16 %v1130
    %v1230 = vunpack.c.l.b16 %v1131
    %v1231 = vunpack.c.h.b16 %v1131
    %v1232 = vunpack.c.l.b16 %v1132
    %v1233 = vunpack.c.h.b16 %v1132
    %v1234 = vunpack.c.l.b16 %v1133
    %v1235 = vunpack.c.h.b16 %v1133
    %v1236 = vunpack.c.l.b16 %v1134
    %v1237 = vunpack.c.h.b16 %v1134
    %v1238 = vpack.c.b16 %v1176, %v1174
    %v1239 = vpack.c.b16 %v1177, %v1175
    %v1240 = vpack.c.b16 %v1180, %v1178
    %v1241 = vpack.c.b16 %v1181, %v1179
    %v1242 = vpack.c.b16 %v1184, %v1182
    %v1243 = vpack.c.b16 %v1185, %v1183
    %v1244 = vpack.c.b16 %v1188, %v1186
    %v1245 = vpack.c.b16 %v1189, %v1187
    %v1246 = vpack.c.b16 %v1192, %v1190
    %v1247 = vpack.c.b16 %v1193, %v1191
    %v1248 = vpack.c.b16 %v1196, %v1194
    %v1249 = vpack.c.b16 %v1197, %v1195
    %v1250 = vpack.c.b16 %v1200, %v1198
    %v1251 = vpack.c.b16 %v1201, %v1199
    %v1252 = vpack.c.b16 %v1204, %v1202
    %v1253 = vpack.c.b16 %v1205, %v1203
    %v1254 = vpack.c.b16 %v1208, %v1206
    %v1255 = vpack.c.b16 %v1209, %v1207
    %v1256 = vpack.c.b16 %v1212, %v1210
    %v1257 = vpack.c.b16 %v1213, %v1211
    %v1258 = vpack.c.b16 %v1216, %v1214
    %v1259 = vpack.c.b16 %v1217, %v1215
    %v1260 = vpack.c.b16 %v1220, %v1218
    %v1261 = vpack.c.b16 %v1221, %v1219
    %v1262 = vpack.c.b16 %v1224, %v1222
    %v1263 = vpack.c.b16 %v1225, %v1223
    %v1264 = vpack.c.b16 %v1228, %v1226
    %v1265 = vpack.c.b16 %v1229, %v1227
    %v1266 = vpack.c.b16 %v1232, %v1230
    %v1267 = vpack.c.b16 %v1233, %v1231
    %v1268 = vpack.c.b16 %v1236, %v1234
    %v1269 = vpack.c.b16 %v1237, %v1235
    %1302 = vmatpush.bf16.msra.mxu0 %v1252
    %1303 = vmatpush.bf16.msra.mxu0 %v1250
    %1304 = vmatpush.bf16.msra.mxu0 %v1248
    %1305 = vmatpush.bf16.msra.mxu0 %v1246
    %1306 = vmatpush.bf16.msra.mxu0 %v1244
    %1307 = vmatpush.bf16.msra.mxu0 %v1242
    %1308 = vmatpush.bf16.msra.mxu0 %v1240
    %1309 = vmatpush.bf16.msra.mxu0 %v1238
    %1310 = vmatmul.bf16.gmra.mxu0 %v1100
    %v1311 = vpop.f32.mrf.mxu0
    %v1312 = vadd.f32 %v1138, %v1311
    %v1313 = vpop.f32.mrf.mxu0
    %v1314 = vadd.f32 %v1138, %v1313
    %1315 = vdwg.mxu0
    %1316 = vmatpush.bf16.msra.mxu0 %v1268
    %1317 = vmatpush.bf16.msra.mxu0 %v1266
    %1318 = vmatpush.bf16.msra.mxu0 %v1264
    %1319 = vmatpush.bf16.msra.mxu0 %v1262
    %1320 = vmatpush.bf16.msra.mxu0 %v1260
    %1321 = vmatpush.bf16.msra.mxu0 %v1258
    %1322 = vmatpush.bf16.msra.mxu0 %v1256
    %1323 = vmatpush.bf16.msra.mxu0 %v1254
    %1324 = vmatmul.bf16.gmra.mxu0 %v1101
    %v1325 = vpop.f32.mrf.mxu0
    %v1326 = vadd.f32 %v1312, %v1325
    %v1327 = vpop.f32.mrf.mxu0
    %v1328 = vadd.f32 %v1314, %v1327
    %1329 = vdwg.mxu0
    %1330 = vmatpush.bf16.msra.mxu0 %v1253
    %1331 = vmatpush.bf16.msra.mxu0 %v1251
    %1332 = vmatpush.bf16.msra.mxu0 %v1249
    %1333 = vmatpush.bf16.msra.mxu0 %v1247
    %1334 = vmatpush.bf16.msra.mxu0 %v1245
    %1335 = vmatpush.bf16.msra.mxu0 %v1243
    %1336 = vmatpush.bf16.msra.mxu0 %v1241
    %1337 = vmatpush.bf16.msra.mxu0 %v1239
    %1338 = vmatmul.bf16.gmra.mxu0 %v1100
    %v1339 = vpop.f32.mrf.mxu0
    %v1340 = vadd.f32 %v1139, %v1339
    %v1341 = vpop.f32.mrf.mxu0
    %v1342 = vadd.f32 %v1139, %v1341
    %1343 = vdwg.mxu0
    %1344 = vmatpush.bf16.msra.mxu0 %v1269
    %1345 = vmatpush.bf16.msra.mxu0 %v1267
    %1346 = vmatpush.bf16.msra.mxu0 %v1265
    %1347 = vmatpush.bf16.msra.mxu0 %v1263
    %1348 = vmatpush.bf16.msra.mxu0 %v1261
    %1349 = vmatpush.bf16.msra.mxu0 %v1259
    %1350 = vmatpush.bf16.msra.mxu0 %v1257
    %1351 = vmatpush.bf16.msra.mxu0 %v1255
    %1352 = vmatmul.bf16.gmra.mxu0 %v1101
    %v1353 = vpop.f32.mrf.mxu0
    %v1354 = vadd.f32 %v1340, %v1353
    %v1355 = vpop.f32.mrf.mxu0
    %v1356 = vadd.f32 %v1342, %v1355
    %1357 = vdwg.mxu0
    %v1358 = vadd.f32 %v1326, %v1354
    %1359 = vadd.xlane.f32.xlu0 %v1358
    %v1360 = vpop.xlane.xlu0 %1359
    %v1361 = vadd.f32 %v1328, %v1356
    %1362 = vadd.xlane.f32.xlu0 %v1361
    %v1363 = vpop.xlane.xlu0 %1362
    %v1364 = vmul.f32 %v1360, %v213
    %v1365 = vmul.f32 %v1363, %v213
    %v1366 = vsub.f32 %v1326, %v1364
    %v1367 = vsub.f32 %v1354, %v1364
    %v1368 = vsub.f32 %v1328, %v1365
    %v1369 = vsub.f32 %v1356, %v1365
    %v1370 = vmul.f32 %v1366, %v1366
    %v1371 = vmul.f32 %v1367, %v1367
    %v1372 = vmul.f32 %v1368, %v1368
    %v1373 = vmul.f32 %v1369, %v1369
    %v1374 = vadd.f32 %v1370, %v1371
    %1375 = vadd.xlane.f32.xlu0 %v1374
    %v1376 = vpop.xlane.xlu0 %1375
    %v1377 = vadd.f32 %v1372, %v1373
    %1378 = vadd.xlane.f32.xlu0 %v1377
    %v1379 = vpop.xlane.xlu0 %1378
    %v1380 = vmul.f32 %v1376, %v213
    %v1381 = vmul.f32 %v1379, %v213
    %v1382 = vadd.f32 %v1380, 1e-05
    %v1383 = vadd.f32 %v1381, 1e-05
    %v1384 = vrsqrt.pop %v1382
    %v1385 = vmul.f32 %v1384, %v1382
    %v1386 = vmul.f32 %v1385, %v1384
    %v1387 = vmul.f32 0.5, %v1386
    %v1388 = vsub.f32 1.5, %v1387
    %v1389 = vmul.f32 %v1384, %v1388
    %vm1390 = vweird.f32 %v1382
    %vm1391 = vweird.f32 %v1384
    %vm1392 = vmor %vm1390, %vm1391
    %v1393 = vsel %vm1392, %v1384, %v1389
    %v1394 = vrsqrt.pop %v1383
    %v1395 = vmul.f32 %v1394, %v1383
    %v1396 = vmul.f32 %v1395, %v1394
    %v1397 = vmul.f32 0.5, %v1396
    %v1398 = vsub.f32 1.5, %v1397
    %v1399 = vmul.f32 %v1394, %v1398
    %vm1400 = vweird.f32 %v1383
    %vm1401 = vweird.f32 %v1394
    %vm1402 = vmor %vm1400, %vm1401
    %v1403 = vsel %vm1402, %v1394, %v1399
    %v1404 = vmul.f32 %v1366, %v1393
    %v1405 = vmul.f32 %v1367, %v1393
    %v1406 = vmul.f32 %v1368, %v1403
    %v1407 = vmul.f32 %v1369, %v1403
    %s1408 = scalar_lea.vmem %s4, 6
    %v1409 = vld [vmem:[%s1408] ss:$8 sm:$0x3]
    %s1410 = scalar_lea.vmem %s4, 7
    %v1411 = vld [vmem:[%s1410] ss:$8 sm:$0x3]
    %v1412 = vpack.c.bf16 %v1405, %v1404
    %v1413 = vpack.c.bf16 %v1407, %v1406
    %v1415 = vperm.slane %v1409, 0
    %v1416 = vperm.slane %v1409, 1
    %v1419 = vpack.c.bf16 %v1416, %v1415
    %v1421 = vunpack.c.l.b16 %v1419
    %v1422 = vunpack.c.h.b16 %v1419
    %v1423 = vpack.c.b16 %v1421, %v1421
    %v1424 = vpack.c.b16 %v1422, %v1422
    %v1426 = vpack.i.b16 %v1423, %v1423
    %v1428 = vperm.slane %v1426, 0
    %v1430 = vpack.i.b16 %v1424, %v1424
    %v1432 = vperm.slane %v1430, 0
    %v1433 = vunpack.c.l.bf16 %v1412
    %v1434 = vunpack.c.h.bf16 %v1412
    %v1435 = vunpack.c.l.bf16 %v1413
    %v1436 = vunpack.c.h.bf16 %v1413
    %v1437 = vunpack.c.l.bf16 %v1428
    %v1438 = vunpack.c.l.bf16 %v1432
    %v1439 = vmul.f32 %v1433, %v1437
    %v1440 = vmul.f32 %v1434, %v1438
    %v1441 = vmul.f32 %v1435, %v1437
    %v1442 = vmul.f32 %v1436, %v1438
    %v1443 = vpack.c.bf16 %v1440, %v1439
    %v1444 = vpack.c.bf16 %v1442, %v1441
    %v1446 = vperm.slane %v1411, 0
    %v1447 = vperm.slane %v1411, 1
    %v1450 = vpack.c.bf16 %v1447, %v1446
    %v1452 = vunpack.c.l.b16 %v1450
    %v1453 = vunpack.c.h.b16 %v1450
    %v1454 = vpack.c.b16 %v1452, %v1452
    %v1455 = vpack.c.b16 %v1453, %v1453
    %v1457 = vpack.i.b16 %v1454, %v1454
    %v1459 = vperm.slane %v1457, 0
    %v1461 = vpack.i.b16 %v1455, %v1455
    %v1463 = vperm.slane %v1461, 0
    %v1464 = vunpack.c.l.bf16 %v1443
    %v1465 = vunpack.c.h.bf16 %v1443
    %v1466 = vunpack.c.l.bf16 %v1444
    %v1467 = vunpack.c.h.bf16 %v1444
    %v1468 = vunpack.c.l.bf16 %v1459
    %v1469 = vunpack.c.l.bf16 %v1463
    %v1470 = vadd.f32 %v1464, %v1468
    %v1471 = vadd.f32 %v1465, %v1469
    %v1472 = vadd.f32 %v1466, %v1468
    %v1473 = vadd.f32 %v1467, %v1469
    %v1474 = vpack.c.bf16 %v1471, %v1470
    %v1475 = vpack.c.bf16 %v1473, %v1472
    %v1476 = vunpack.c.l.bf16 %v1474
    %v1477 = vunpack.c.h.bf16 %v1474
    %v1478 = vunpack.c.l.bf16 %v1475
    %v1479 = vunpack.c.h.bf16 %v1475
    %v1480 = vmax.f32 %v1476, 0.0
    %v1481 = vmax.f32 %v1477, 0.0
    %v1482 = vmax.f32 %v1478, 0.0
    %v1483 = vmax.f32 %v1479, 0.0
    %v1484 = vpack.c.bf16 %v1482, %v1480
    %v1485 = vpack.c.bf16 %v1483, %v1481
    %s1486 = scalar_lea.vmem [#allocation2], 768
    %v1487 = vld [vmem:[%s1486] sm:$0xff]
    %v1488 = vld [vmem:[%s1486 + $0x8] sm:$0xff]
    %v1489 = vld [vmem:[%s1486 + $0x10] sm:$0xff]
    %v1490 = vld [vmem:[%s1486 + $0x18] sm:$0xff]
    %v1491 = vld [vmem:[%s1486 + $0x20] sm:$0xff]
    %v1492 = vld [vmem:[%s1486 + $0x28] sm:$0xff]
    %v1493 = vld [vmem:[%s1486 + $0x30] sm:$0xff]
    %v1494 = vld [vmem:[%s1486 + $0x38] sm:$0xff]
    %v1495 = vld [vmem:[%s1486 + $0x40] sm:$0xff]
    %v1496 = vld [vmem:[%s1486 + $0x48] sm:$0xff]
    %v1497 = vld [vmem:[%s1486 + $0x50] sm:$0xff]
    %v1498 = vld [vmem:[%s1486 + $0x58] sm:$0xff]
    %v1499 = vld [vmem:[%s1486 + $0x60] sm:$0xff]
    %v1500 = vld [vmem:[%s1486 + $0x68] sm:$0xff]
    %v1501 = vld [vmem:[%s1486 + $0x70] sm:$0xff]
    %v1502 = vld [vmem:[%s1486 + $0x78] sm:$0xff]
    %v1503 = vld [vmem:[%s1486 + $0x80] sm:$0xff]
    %v1504 = vld [vmem:[%s1486 + $0x88] sm:$0xff]
    %v1505 = vld [vmem:[%s1486 + $0x90] sm:$0xff]
    %v1506 = vld [vmem:[%s1486 + $0x98] sm:$0xff]
    %v1507 = vld [vmem:[%s1486 + $0xa0] sm:$0xff]
    %v1508 = vld [vmem:[%s1486 + $0xa8] sm:$0xff]
    %v1509 = vld [vmem:[%s1486 + $0xb0] sm:$0xff]
    %v1510 = vld [vmem:[%s1486 + $0xb8] sm:$0xff]
    %v1511 = vld [vmem:[%s1486 + $0xc0] sm:$0xff]
    %v1512 = vld [vmem:[%s1486 + $0xc8] sm:$0xff]
    %v1513 = vld [vmem:[%s1486 + $0xd0] sm:$0xff]
    %v1514 = vld [vmem:[%s1486 + $0xd8] sm:$0xff]
    %v1515 = vld [vmem:[%s1486 + $0xe0] sm:$0xff]
    %v1516 = vld [vmem:[%s1486 + $0xe8] sm:$0xff]
    %v1517 = vld [vmem:[%s1486 + $0xf0] sm:$0xff]
    %v1518 = vld [vmem:[%s1486 + $0xf8] sm:$0xff]
    %s1519 = scalar_lea.vmem [#allocation4], 4
    %v1520 = vld [vmem:[%s1519] ss:$8 sm:$0x3]
    %v1522 = vperm.slane %v1520, 0
    %v1523 = vperm.slane %v1520, 1
    %v1558 = vunpack.c.l.b16 %v1487
    %v1559 = vunpack.c.h.b16 %v1487
    %v1560 = vunpack.c.l.b16 %v1488
    %v1561 = vunpack.c.h.b16 %v1488
    %v1562 = vunpack.c.l.b16 %v1489
    %v1563 = vunpack.c.h.b16 %v1489
    %v1564 = vunpack.c.l.b16 %v1490
    %v1565 = vunpack.c.h.b16 %v1490
    %v1566 = vunpack.c.l.b16 %v1491
    %v1567 = vunpack.c.h.b16 %v1491
    %v1568 = vunpack.c.l.b16 %v1492
    %v1569 = vunpack.c.h.b16 %v1492
    %v1570 = vunpack.c.l.b16 %v1493
    %v1571 = vunpack.c.h.b16 %v1493
    %v1572 = vunpack.c.l.b16 %v1494
    %v1573 = vunpack.c.h.b16 %v1494
    %v1574 = vunpack.c.l.b16 %v1495
    %v1575 = vunpack.c.h.b16 %v1495
    %v1576 = vunpack.c.l.b16 %v1496
    %v1577 = vunpack.c.h.b16 %v1496
    %v1578 = vunpack.c.l.b16 %v1497
    %v1579 = vunpack.c.h.b16 %v1497
    %v1580 = vunpack.c.l.b16 %v1498
    %v1581 = vunpack.c.h.b16 %v1498
    %v1582 = vunpack.c.l.b16 %v1499
    %v1583 = vunpack.c.h.b16 %v1499
    %v1584 = vunpack.c.l.b16 %v1500
    %v1585 = vunpack.c.h.b16 %v1500
    %v1586 = vunpack.c.l.b16 %v1501
    %v1587 = vunpack.c.h.b16 %v1501
    %v1588 = vunpack.c.l.b16 %v1502
    %v1589 = vunpack.c.h.b16 %v1502
    %v1590 = vunpack.c.l.b16 %v1503
    %v1591 = vunpack.c.h.b16 %v1503
    %v1592 = vunpack.c.l.b16 %v1504
    %v1593 = vunpack.c.h.b16 %v1504
    %v1594 = vunpack.c.l.b16 %v1505
    %v1595 = vunpack.c.h.b16 %v1505
    %v1596 = vunpack.c.l.b16 %v1506
    %v1597 = vunpack.c.h.b16 %v1506
    %v1598 = vunpack.c.l.b16 %v1507
    %v1599 = vunpack.c.h.b16 %v1507
    %v1600 = vunpack.c.l.b16 %v1508
    %v1601 = vunpack.c.h.b16 %v1508
    %v1602 = vunpack.c.l.b16 %v1509
    %v1603 = vunpack.c.h.b16 %v1509
    %v1604 = vunpack.c.l.b16 %v1510
    %v1605 = vunpack.c.h.b16 %v1510
    %v1606 = vunpack.c.l.b16 %v1511
    %v1607 = vunpack.c.h.b16 %v1511
    %v1608 = vunpack.c.l.b16 %v1512
    %v1609 = vunpack.c.h.b16 %v1512
    %v1610 = vunpack.c.l.b16 %v1513
    %v1611 = vunpack.c.h.b16 %v1513
    %v1612 = vunpack.c.l.b16 %v1514
    %v1613 = vunpack.c.h.b16 %v1514
    %v1614 = vunpack.c.l.b16 %v1515
    %v1615 = vunpack.c.h.b16 %v1515
    %v1616 = vunpack.c.l.b16 %v1516
    %v1617 = vunpack.c.h.b16 %v1516
    %v1618 = vunpack.c.l.b16 %v1517
    %v1619 = vunpack.c.h.b16 %v1517
    %v1620 = vunpack.c.l.b16 %v1518
    %v1621 = vunpack.c.h.b16 %v1518
    %v1622 = vpack.c.b16 %v1560, %v1558
    %v1623 = vpack.c.b16 %v1561, %v1559
    %v1624 = vpack.c.b16 %v1564, %v1562
    %v1625 = vpack.c.b16 %v1565, %v1563
    %v1626 = vpack.c.b16 %v1568, %v1566
    %v1627 = vpack.c.b16 %v1569, %v1567
    %v1628 = vpack.c.b16 %v1572, %v1570
    %v1629 = vpack.c.b16 %v1573, %v1571
    %v1630 = vpack.c.b16 %v1576, %v1574
    %v1631 = vpack.c.b16 %v1577, %v1575
    %v1632 = vpack.c.b16 %v1580, %v1578
    %v1633 = vpack.c.b16 %v1581, %v1579
    %v1634 = vpack.c.b16 %v1584, %v1582
    %v1635 = vpack.c.b16 %v1585, %v1583
    %v1636 = vpack.c.b16 %v1588, %v1586
    %v1637 = vpack.c.b16 %v1589, %v1587
    %v1638 = vpack.c.b16 %v1592, %v1590
    %v1639 = vpack.c.b16 %v1593, %v1591
    %v1640 = vpack.c.b16 %v1596, %v1594
    %v1641 = vpack.c.b16 %v1597, %v1595
    %v1642 = vpack.c.b16 %v1600, %v1598
    %v1643 = vpack.c.b16 %v1601, %v1599
    %v1644 = vpack.c.b16 %v1604, %v1602
    %v1645 = vpack.c.b16 %v1605, %v1603
    %v1646 = vpack.c.b16 %v1608, %v1606
    %v1647 = vpack.c.b16 %v1609, %v1607
    %v1648 = vpack.c.b16 %v1612, %v1610
    %v1649 = vpack.c.b16 %v1613, %v1611
    %v1650 = vpack.c.b16 %v1616, %v1614
    %v1651 = vpack.c.b16 %v1617, %v1615
    %v1652 = vpack.c.b16 %v1620, %v1618
    %v1653 = vpack.c.b16 %v1621, %v1619
    %1686 = vmatpush.bf16.msra.mxu0 %v1636
    %1687 = vmatpush.bf16.msra.mxu0 %v1634
    %1688 = vmatpush.bf16.msra.mxu0 %v1632
    %1689 = vmatpush.bf16.msra.mxu0 %v1630
    %1690 = vmatpush.bf16.msra.mxu0 %v1628
    %1691 = vmatpush.bf16.msra.mxu0 %v1626
    %1692 = vmatpush.bf16.msra.mxu0 %v1624
    %1693 = vmatpush.bf16.msra.mxu0 %v1622
    %1694 = vmatmul.bf16.gmra.mxu0 %v1484
    %v1695 = vpop.f32.mrf.mxu0
    %v1696 = vadd.f32 %v1522, %v1695
    %v1697 = vpop.f32.mrf.mxu0
    %v1698 = vadd.f32 %v1522, %v1697
    %1699 = vdwg.mxu0
    %1700 = vmatpush.bf16.msra.mxu0 %v1652
    %1701 = vmatpush.bf16.msra.mxu0 %v1650
    %1702 = vmatpush.bf16.msra.mxu0 %v1648
    %1703 = vmatpush.bf16.msra.mxu0 %v1646
    %1704 = vmatpush.bf16.msra.mxu0 %v1644
    %1705 = vmatpush.bf16.msra.mxu0 %v1642
    %1706 = vmatpush.bf16.msra.mxu0 %v1640
    %1707 = vmatpush.bf16.msra.mxu0 %v1638
    %1708 = vmatmul.bf16.gmra.mxu0 %v1485
    %v1709 = vpop.f32.mrf.mxu0
    %v1710 = vadd.f32 %v1696, %v1709
    %v1711 = vpop.f32.mrf.mxu0
    %v1712 = vadd.f32 %v1698, %v1711
    %1713 = vdwg.mxu0
    %1714 = vmatpush.bf16.msra.mxu0 %v1637
    %1715 = vmatpush.bf16.msra.mxu0 %v1635
    %1716 = vmatpush.bf16.msra.mxu0 %v1633
    %1717 = vmatpush.bf16.msra.mxu0 %v1631
    %1718 = vmatpush.bf16.msra.mxu0 %v1629
    %1719 = vmatpush.bf16.msra.mxu0 %v1627
    %1720 = vmatpush.bf16.msra.mxu0 %v1625
    %1721 = vmatpush.bf16.msra.mxu0 %v1623
    %1722 = vmatmul.bf16.gmra.mxu0 %v1484
    %v1723 = vpop.f32.mrf.mxu0
    %v1724 = vadd.f32 %v1523, %v1723
    %v1725 = vpop.f32.mrf.mxu0
    %v1726 = vadd.f32 %v1523, %v1725
    %1727 = vdwg.mxu0
    %1728 = vmatpush.bf16.msra.mxu0 %v1653
    %1729 = vmatpush.bf16.msra.mxu0 %v1651
    %1730 = vmatpush.bf16.msra.mxu0 %v1649
    %1731 = vmatpush.bf16.msra.mxu0 %v1647
    %1732 = vmatpush.bf16.msra.mxu0 %v1645
    %1733 = vmatpush.bf16.msra.mxu0 %v1643
    %1734 = vmatpush.bf16.msra.mxu0 %v1641
    %1735 = vmatpush.bf16.msra.mxu0 %v1639
    %1736 = vmatmul.bf16.gmra.mxu0 %v1485
    %v1737 = vpop.f32.mrf.mxu0
    %v1738 = vadd.f32 %v1724, %v1737
    %v1739 = vpop.f32.mrf.mxu0
    %v1740 = vadd.f32 %v1726, %v1739
    %1741 = vdwg.mxu0
    %v1742 = vadd.f32 %v1710, %v1738
    %1743 = vadd.xlane.f32.xlu0 %v1742
    %v1744 = vpop.xlane.xlu0 %1743
    %v1745 = vadd.f32 %v1712, %v1740
    %1746 = vadd.xlane.f32.xlu0 %v1745
    %v1747 = vpop.xlane.xlu0 %1746
    %v1748 = vmul.f32 %v1744, %v213
    %v1749 = vmul.f32 %v1747, %v213
    %v1750 = vsub.f32 %v1710, %v1748
    %v1751 = vsub.f32 %v1738, %v1748
    %v1752 = vsub.f32 %v1712, %v1749
    %v1753 = vsub.f32 %v1740, %v1749
    %v1754 = vmul.f32 %v1750, %v1750
    %v1755 = vmul.f32 %v1751, %v1751
    %v1756 = vmul.f32 %v1752, %v1752
    %v1757 = vmul.f32 %v1753, %v1753
    %v1758 = vadd.f32 %v1754, %v1755
    %1759 = vadd.xlane.f32.xlu0 %v1758
    %v1760 = vpop.xlane.xlu0 %1759
    %v1761 = vadd.f32 %v1756, %v1757
    %1762 = vadd.xlane.f32.xlu0 %v1761
    %v1763 = vpop.xlane.xlu0 %1762
    %v1764 = vmul.f32 %v1760, %v213
    %v1765 = vmul.f32 %v1763, %v213
    %v1766 = vadd.f32 %v1764, 1e-05
    %v1767 = vadd.f32 %v1765, 1e-05
    %v1768 = vrsqrt.pop %v1766
    %v1769 = vmul.f32 %v1768, %v1766
    %v1770 = vmul.f32 %v1769, %v1768
    %v1771 = vmul.f32 0.5, %v1770
    %v1772 = vsub.f32 1.5, %v1771
    %v1773 = vmul.f32 %v1768, %v1772
    %vm1774 = vweird.f32 %v1766
    %vm1775 = vweird.f32 %v1768
    %vm1776 = vmor %vm1774, %vm1775
    %v1777 = vsel %vm1776, %v1768, %v1773
    %v1778 = vrsqrt.pop %v1767
    %v1779 = vmul.f32 %v1778, %v1767
    %v1780 = vmul.f32 %v1779, %v1778
    %v1781 = vmul.f32 0.5, %v1780
    %v1782 = vsub.f32 1.5, %v1781
    %v1783 = vmul.f32 %v1778, %v1782
    %vm1784 = vweird.f32 %v1767
    %vm1785 = vweird.f32 %v1778
    %vm1786 = vmor %vm1784, %vm1785
    %v1787 = vsel %vm1786, %v1778, %v1783
    %v1788 = vmul.f32 %v1750, %v1777
    %v1789 = vmul.f32 %v1751, %v1777
    %v1790 = vmul.f32 %v1752, %v1787
    %v1791 = vmul.f32 %v1753, %v1787
    %s1792 = scalar_lea.vmem %s4, 16
    %v1793 = vld [vmem:[%s1792] ss:$8 sm:$0x3]
    %s1794 = scalar_lea.vmem %s4, 17
    %v1795 = vld [vmem:[%s1794] ss:$8 sm:$0x3]
    %v1796 = vpack.c.bf16 %v1789, %v1788
    %v1797 = vpack.c.bf16 %v1791, %v1790
    %v1799 = vperm.slane %v1793, 0
    %v1800 = vperm.slane %v1793, 1
    %v1803 = vpack.c.bf16 %v1800, %v1799
    %v1805 = vunpack.c.l.b16 %v1803
    %v1806 = vunpack.c.h.b16 %v1803
    %v1807 = vpack.c.b16 %v1805, %v1805
    %v1808 = vpack.c.b16 %v1806, %v1806
    %v1810 = vpack.i.b16 %v1807, %v1807
    %v1812 = vperm.slane %v1810, 0
    %v1814 = vpack.i.b16 %v1808, %v1808
    %v1816 = vperm.slane %v1814, 0
    %v1817 = vunpack.c.l.bf16 %v1796
    %v1818 = vunpack.c.h.bf16 %v1796
    %v1819 = vunpack.c.l.bf16 %v1797
    %v1820 = vunpack.c.h.bf16 %v1797
    %v1821 = vunpack.c.l.bf16 %v1812
    %v1822 = vunpack.c.l.bf16 %v1816
    %v1823 = vmul.f32 %v1817, %v1821
    %v1824 = vmul.f32 %v1818, %v1822
    %v1825 = vmul.f32 %v1819, %v1821
    %v1826 = vmul.f32 %v1820, %v1822
    %v1827 = vpack.c.bf16 %v1824, %v1823
    %v1828 = vpack.c.bf16 %v1826, %v1825
    %v1830 = vperm.slane %v1795, 0
    %v1831 = vperm.slane %v1795, 1
    %v1834 = vpack.c.bf16 %v1831, %v1830
    %v1836 = vunpack.c.l.b16 %v1834
    %v1837 = vunpack.c.h.b16 %v1834
    %v1838 = vpack.c.b16 %v1836, %v1836
    %v1839 = vpack.c.b16 %v1837, %v1837
    %v1841 = vpack.i.b16 %v1838, %v1838
    %v1843 = vperm.slane %v1841, 0
    %v1845 = vpack.i.b16 %v1839, %v1839
    %v1847 = vperm.slane %v1845, 0
    %v1848 = vunpack.c.l.bf16 %v1827
    %v1849 = vunpack.c.h.bf16 %v1827
    %v1850 = vunpack.c.l.bf16 %v1828
    %v1851 = vunpack.c.h.bf16 %v1828
    %v1852 = vunpack.c.l.bf16 %v1843
    %v1853 = vunpack.c.l.bf16 %v1847
    %v1854 = vadd.f32 %v1848, %v1852
    %v1855 = vadd.f32 %v1849, %v1853
    %v1856 = vadd.f32 %v1850, %v1852
    %v1857 = vadd.f32 %v1851, %v1853
    %v1858 = vpack.c.bf16 %v1855, %v1854
    %v1859 = vpack.c.bf16 %v1857, %v1856
    %v1860 = vunpack.c.l.bf16 %v1858
    %v1861 = vunpack.c.h.bf16 %v1858
    %v1862 = vunpack.c.l.bf16 %v1859
    %v1863 = vunpack.c.h.bf16 %v1859
    %v1864 = vmax.f32 %v1860, 0.0
    %v1865 = vmax.f32 %v1861, 0.0
    %v1866 = vmax.f32 %v1862, 0.0
    %v1867 = vmax.f32 %v1863, 0.0
    %v1868 = vpack.c.bf16 %v1866, %v1864
    %v1869 = vpack.c.bf16 %v1867, %v1865
    %v1870 = vld [vmem:[%s5] sm:$0xf]
    %v1871 = vld [vmem:[%s5 + $0x4] sm:$0xf]
    %v1872 = vld [vmem:[%s5 + $0x8] sm:$0xf]
    %v1873 = vld [vmem:[%s5 + $0xc] sm:$0xf]
    %v1874 = vld [vmem:[%s5 + $0x10] sm:$0xf]
    %v1875 = vld [vmem:[%s5 + $0x14] sm:$0xf]
    %v1876 = vld [vmem:[%s5 + $0x18] sm:$0xf]
    %v1877 = vld [vmem:[%s5 + $0x1c] sm:$0xf]
    %v1878 = vld [vmem:[%s5 + $0x20] sm:$0xf]
    %v1879 = vld [vmem:[%s5 + $0x24] sm:$0xf]
    %v1880 = vld [vmem:[%s5 + $0x28] sm:$0xf]
    %v1881 = vld [vmem:[%s5 + $0x2c] sm:$0xf]
    %v1882 = vld [vmem:[%s5 + $0x30] sm:$0xf]
    %v1883 = vld [vmem:[%s5 + $0x34] sm:$0xf]
    %v1884 = vld [vmem:[%s5 + $0x38] sm:$0xf]
    %v1885 = vld [vmem:[%s5 + $0x3c] sm:$0xf]
    %v1886 = vld [vmem:[%s5 + $0x40] sm:$0xf]
    %v1887 = vld [vmem:[%s5 + $0x44] sm:$0xf]
    %v1888 = vld [vmem:[%s5 + $0x48] sm:$0xf]
    %v1889 = vld [vmem:[%s5 + $0x4c] sm:$0xf]
    %v1890 = vld [vmem:[%s5 + $0x50] sm:$0xf]
    %v1891 = vld [vmem:[%s5 + $0x54] sm:$0xf]
    %v1892 = vld [vmem:[%s5 + $0x58] sm:$0xf]
    %v1893 = vld [vmem:[%s5 + $0x5c] sm:$0xf]
    %v1894 = vld [vmem:[%s5 + $0x60] sm:$0xf]
    %v1895 = vld [vmem:[%s5 + $0x64] sm:$0xf]
    %v1896 = vld [vmem:[%s5 + $0x68] sm:$0xf]
    %v1897 = vld [vmem:[%s5 + $0x6c] sm:$0xf]
    %v1898 = vld [vmem:[%s5 + $0x70] sm:$0xf]
    %v1899 = vld [vmem:[%s5 + $0x74] sm:$0xf]
    %v1900 = vld [vmem:[%s5 + $0x78] sm:$0xf]
    %v1901 = vld [vmem:[%s5 + $0x7c] sm:$0xf]
    %v1902 = vld [vmem:[%s6] sm:$0x1]
    %v1904 = vperm.slane %v1902, 0
    %v1938 = vunpack.c.l.b16 %v1870
    %v1939 = vunpack.c.l.b16 %v1871
    %v1940 = vunpack.c.l.b16 %v1872
    %v1941 = vunpack.c.l.b16 %v1873
    %v1942 = vunpack.c.l.b16 %v1874
    %v1943 = vunpack.c.l.b16 %v1875
    %v1944 = vunpack.c.l.b16 %v1876
    %v1945 = vunpack.c.l.b16 %v1877
    %v1946 = vunpack.c.l.b16 %v1878
    %v1947 = vunpack.c.l.b16 %v1879
    %v1948 = vunpack.c.l.b16 %v1880
    %v1949 = vunpack.c.l.b16 %v1881
    %v1950 = vunpack.c.l.b16 %v1882
    %v1951 = vunpack.c.l.b16 %v1883
    %v1952 = vunpack.c.l.b16 %v1884
    %v1953 = vunpack.c.l.b16 %v1885
    %v1954 = vunpack.c.l.b16 %v1886
    %v1955 = vunpack.c.l.b16 %v1887
    %v1956 = vunpack.c.l.b16 %v1888
    %v1957 = vunpack.c.l.b16 %v1889
    %v1958 = vunpack.c.l.b16 %v1890
    %v1959 = vunpack.c.l.b16 %v1891
    %v1960 = vunpack.c.l.b16 %v1892
    %v1961 = vunpack.c.l.b16 %v1893
    %v1962 = vunpack.c.l.b16 %v1894
    %v1963 = vunpack.c.l.b16 %v1895
    %v1964 = vunpack.c.l.b16 %v1896
    %v1965 = vunpack.c.l.b16 %v1897
    %v1966 = vunpack.c.l.b16 %v1898
    %v1967 = vunpack.c.l.b16 %v1899
    %v1968 = vunpack.c.l.b16 %v1900
    %v1969 = vunpack.c.l.b16 %v1901
    %v1970 = vpack.c.b16 %v1939, %v1938
    %v1971 = vpack.c.b16 %v1941, %v1940
    %v1972 = vpack.c.b16 %v1943, %v1942
    %v1973 = vpack.c.b16 %v1945, %v1944
    %v1974 = vpack.c.b16 %v1947, %v1946
    %v1975 = vpack.c.b16 %v1949, %v1948
    %v1976 = vpack.c.b16 %v1951, %v1950
    %v1977 = vpack.c.b16 %v1953, %v1952
    %v1978 = vpack.c.b16 %v1955, %v1954
    %v1979 = vpack.c.b16 %v1957, %v1956
    %v1980 = vpack.c.b16 %v1959, %v1958
    %v1981 = vpack.c.b16 %v1961, %v1960
    %v1982 = vpack.c.b16 %v1963, %v1962
    %v1983 = vpack.c.b16 %v1965, %v1964
    %v1984 = vpack.c.b16 %v1967, %v1966
    %v1985 = vpack.c.b16 %v1969, %v1968
    %2002 = vmatpush.bf16.msra.mxu0 %v1977
    %2003 = vmatpush.bf16.msra.mxu0 %v1976
    %2004 = vmatpush.bf16.msra.mxu0 %v1975
    %2005 = vmatpush.bf16.msra.mxu0 %v1974
    %2006 = vmatpush.bf16.msra.mxu0 %v1973
    %2007 = vmatpush.bf16.msra.mxu0 %v1972
    %2008 = vmatpush.bf16.msra.mxu0 %v1971
    %2009 = vmatpush.bf16.msra.mxu0 %v1970
    %2010 = vmatmul.bf16.gmra.mxu0 %v1868
    %v2011 = vpop.f32.mrf.mxu0
    %v2012 = vadd.f32 %v1904, %v2011
    %v2013 = vpop.f32.mrf.mxu0
    %v2014 = vadd.f32 %v1904, %v2013
    %2015 = vdwg.mxu0
    %2016 = vmatpush.bf16.msra.mxu0 %v1985
    %2017 = vmatpush.bf16.msra.mxu0 %v1984
    %2018 = vmatpush.bf16.msra.mxu0 %v1983
    %2019 = vmatpush.bf16.msra.mxu0 %v1982
    %2020 = vmatpush.bf16.msra.mxu0 %v1981
    %2021 = vmatpush.bf16.msra.mxu0 %v1980
    %2022 = vmatpush.bf16.msra.mxu0 %v1979
    %2023 = vmatpush.bf16.msra.mxu0 %v1978
    %2024 = vmatmul.bf16.gmra.mxu0 %v1869
    %v2025 = vpop.f32.mrf.mxu0
    %v2026 = vadd.f32 %v2012, %v2025
    %v2027 = vpop.f32.mrf.mxu0
    %v2028 = vadd.f32 %v2014, %v2027
    %2029 = vdwg.mxu0
    %vm2030 = vcmp.gt.f32.partialorder %v2026, 0.0
    %vm2031 = vcmp.gt.f32.partialorder %v2028, 0.0
    %v2032 = vsel %vm2030, 1, 0
    %v2033 = vsel %vm2031, 1, 0
    %v2034 = vcvt.s32.f32 %v2032
    %v2035 = vcvt.s32.f32 %v2033
    %v2036 = vpack.c.bf16 %v2035, %v2034
    %v2037 = vld [vmem:[%s7] sm:$0xf]
    %v2038 = vld [vmem:[%s7 + $0x4] sm:$0xf]
    %v2039 = vld [vmem:[%s7 + $0x8] sm:$0xf]
    %v2040 = vld [vmem:[%s7 + $0xc] sm:$0xf]
    %v2041 = vld [vmem:[%s7 + $0x10] sm:$0xf]
    %v2042 = vld [vmem:[%s7 + $0x14] sm:$0xf]
    %v2043 = vld [vmem:[%s7 + $0x18] sm:$0xf]
    %v2044 = vld [vmem:[%s7 + $0x1c] sm:$0xf]
    %v2045 = vld [vmem:[%s8] sm:$0x1]
    %v2046 = vperm.slane %v2045, 0
    %v2055 = vunpack.c.l.b16 %v2037
    %v2056 = vunpack.c.l.b16 %v2038
    %v2057 = vunpack.c.l.b16 %v2039
    %v2058 = vunpack.c.l.b16 %v2040
    %v2059 = vunpack.c.l.b16 %v2041
    %v2060 = vunpack.c.l.b16 %v2042
    %v2061 = vunpack.c.l.b16 %v2043
    %v2062 = vunpack.c.l.b16 %v2044
    %v2063 = vpack.c.b16 %v2056, %v2055
    %v2064 = vpack.c.b16 %v2058, %v2057
    %v2065 = vpack.c.b16 %v2060, %v2059
    %v2066 = vpack.c.b16 %v2062, %v2061
    %vm2071 = vcmask 523264
    %v2073 = vsel %vm2071, %v2036, 0
    %2075 = vmatpush.bf16.msra.mxu0 0
    %2076 = vmatpush.bf16.msra.mxu0 0
    %2077 = vmatpush.bf16.msra.mxu0 0
    %2078 = vmatpush.bf16.msra.mxu0 0
    %2079 = vmatpush.bf16.msra.mxu0 %v2066
    %2080 = vmatpush.bf16.msra.mxu0 %v2065
    %2081 = vmatpush.bf16.msra.mxu0 %v2064
    %2082 = vmatpush.bf16.msra.mxu0 %v2063
    %2083 = vmatmul.bf16.gmra.mxu0 %v2073
    %v2084 = vpop.f32.mrf.mxu0
    %v2085 = vadd.f32 %v2046, %v2084
    %v2086 = vpop.f32.mrf.mxu0
    %v2087 = vadd.f32 %v2046, %v2086
    %2088 = vdwg.mxu0
    %v2089 = vmax.f32 %v2085, 0.0
    %v2090 = vmax.f32 %v2087, 0.0
    %v2091 = vpack.c.bf16 %v2090, %v2089
    %s2092 = scalar_lea.vmem %s7, 32
    %v2093 = vld [vmem:[%s2092] sm:$0xf]
    %v2094 = vld [vmem:[%s2092 + $0x4] sm:$0xf]
    %v2095 = vld [vmem:[%s2092 + $0x8] sm:$0xf]
    %v2096 = vld [vmem:[%s2092 + $0xc] sm:$0xf]
    %v2097 = vld [vmem:[%s2092 + $0x10] sm:$0xf]
    %v2098 = vld [vmem:[%s2092 + $0x14] sm:$0xf]
    %v2099 = vld [vmem:[%s2092 + $0x18] sm:$0xf]
    %v2100 = vld [vmem:[%s2092 + $0x1c] sm:$0xf]
    %v2101 = vld [vmem:[%s8 + $0x1] sm:$0x1]
    %v2102 = vperm.slane %v2101, 0
    %v2111 = vunpack.c.l.b16 %v2093
    %v2112 = vunpack.c.l.b16 %v2094
    %v2113 = vunpack.c.l.b16 %v2095
    %v2114 = vunpack.c.l.b16 %v2096
    %v2115 = vunpack.c.l.b16 %v2097
    %v2116 = vunpack.c.l.b16 %v2098
    %v2117 = vunpack.c.l.b16 %v2099
    %v2118 = vunpack.c.l.b16 %v2100
    %v2119 = vpack.c.b16 %v2112, %v2111
    %v2120 = vpack.c.b16 %v2114, %v2113
    %v2121 = vpack.c.b16 %v2116, %v2115
    %v2122 = vpack.c.b16 %v2118, %v2117
    %v2128 = vsel %vm2071, %v2091, 0
    %2130 = vmatpush.bf16.msra.mxu0 0
    %2131 = vmatpush.bf16.msra.mxu0 0
    %2132 = vmatpush.bf16.msra.mxu0 0
    %2133 = vmatpush.bf16.msra.mxu0 0
    %2134 = vmatpush.bf16.msra.mxu0 %v2122
    %2135 = vmatpush.bf16.msra.mxu0 %v2121
    %2136 = vmatpush.bf16.msra.mxu0 %v2120
    %2137 = vmatpush.bf16.msra.mxu0 %v2119
    %2138 = vmatmul.bf16.gmra.mxu0 %v2128
    %v2139 = vpop.f32.mrf.mxu0
    %v2140 = vadd.f32 %v2102, %v2139
    %v2141 = vpop.f32.mrf.mxu0
    %v2142 = vadd.f32 %v2102, %v2141
    %2143 = vdwg.mxu0
    %v2144 = vmax.f32 %v2140, 0.0
    %v2145 = vmax.f32 %v2142, 0.0
    %v2146 = vpack.c.bf16 %v2145, %v2144
    %s2147 = scalar_lea.vmem %s7, 64
    %v2148 = vld [vmem:[%s2147] sm:$0xf]
    %v2149 = vld [vmem:[%s2147 + $0x4] sm:$0xf]
    %v2150 = vld [vmem:[%s2147 + $0x8] sm:$0xf]
    %v2151 = vld [vmem:[%s2147 + $0xc] sm:$0xf]
    %v2152 = vld [vmem:[%s2147 + $0x10] sm:$0xf]
    %v2153 = vld [vmem:[%s2147 + $0x14] sm:$0xf]
    %v2154 = vld [vmem:[%s2147 + $0x18] sm:$0xf]
    %v2155 = vld [vmem:[%s2147 + $0x1c] sm:$0xf]
    %v2156 = vld [vmem:[%s8 + $0x2] sm:$0x1]
    %v2157 = vperm.slane %v2156, 0
    %v2166 = vunpack.c.l.b16 %v2148
    %v2167 = vunpack.c.l.b16 %v2149
    %v2168 = vunpack.c.l.b16 %v2150
    %v2169 = vunpack.c.l.b16 %v2151
    %v2170 = vunpack.c.l.b16 %v2152
    %v2171 = vunpack.c.l.b16 %v2153
    %v2172 = vunpack.c.l.b16 %v2154
    %v2173 = vunpack.c.l.b16 %v2155
    %v2174 = vpack.c.b16 %v2167, %v2166
    %v2175 = vpack.c.b16 %v2169, %v2168
    %v2176 = vpack.c.b16 %v2171, %v2170
    %v2177 = vpack.c.b16 %v2173, %v2172
    %v2183 = vsel %vm2071, %v2146, 0
    %2185 = vmatpush.bf16.msra.mxu0 0
    %2186 = vmatpush.bf16.msra.mxu0 0
    %2187 = vmatpush.bf16.msra.mxu0 0
    %2188 = vmatpush.bf16.msra.mxu0 0
    %2189 = vmatpush.bf16.msra.mxu0 %v2177
    %2190 = vmatpush.bf16.msra.mxu0 %v2176
    %2191 = vmatpush.bf16.msra.mxu0 %v2175
    %2192 = vmatpush.bf16.msra.mxu0 %v2174
    %2193 = vmatmul.bf16.gmra.mxu0 %v2183
    %v2194 = vpop.f32.mrf.mxu0
    %v2195 = vadd.f32 %v2157, %v2194
    %v2196 = vpop.f32.mrf.mxu0
    %v2197 = vadd.f32 %v2157, %v2196
    %2198 = vdwg.mxu0
    %2199 = vst.msk [vmem:[%s9] sm:$0xff] %vm2071, %v2195
    %2200 = vst.msk [vmem:[%s9 + $0x8] sm:$0xff] %vm2071, %v2197
    %2203 = vrot.lane.b32.xlu0 %v2026, 64
    %v2204 = vpop.permute.xlu0 %2203
    %2205 = vrot.lane.b32.xlu0 %v2028, 64
    %v2206 = vpop.permute.xlu0 %2205
    %vm2209 = vcmask 1048064
    %2210 = vst.msk [vmem:[%s9] sm:$0xff] %vm2209, %v2204
    %2211 = vst.msk [vmem:[%s9 + $0x8] sm:$0xff] %vm2209, %v2206
    // Predicated region
    $region46: #{pitch_encoder_forward.1} parent=1 // pred_check
      _
    $region47: #{pitch_encoder_forward.1} parent=1 // pred_check_branch
      %2213 = sbr.rel (0) target = $region49
    $region48: #{pitch_encoder_forward.1} parent=1 // pred_region
      _
    $region49: #{pitch_encoder_forward.1} parent=1 // pred_fallthru
      _
    // Predicated region
    $region50: #{pitch_encoder_forward.1} parent=1 // pred_check
      _
    $region51: #{pitch_encoder_forward.1} parent=1 // pred_check_branch
      %2215 = sbr.rel (0) target = $region53
    $region52: #{pitch_encoder_forward.1} parent=1 // pred_region
      _
    $region53: #{pitch_encoder_forward.1} parent=1 // pred_fallthru
      _
    %2216 = vsyncpa [#allocation3], 1
    %2217 = vsyncpa [#allocation5], 1

</llo_original>
